<compile_context>
chip_gen: v7x
topology: tpu7x:2x2x1
jax: 0.10.0
libtpu: 0.0.40
codegen_flags: <defaults>
</compile_context>

<pallas_src>
import math

import jax
import jax.numpy as jnp
from jax import lax
from jax.experimental import pallas as pl
from jax.experimental.pallas import tpu as pltpu


# ----------------------------------------------------------------------------
# Fused Pallas kernels
# ----------------------------------------------------------------------------
def _make_gru_kernel(num_layers, L, B, H):
    """Fused stacked-GRU + gru_c1 -> normalize -> gru_c2 head (one pallas_call).

    Kernel args (in order):
      x_ref (B, L) f32,
      per layer: w_ih (D_in, 3H) [f32 for layer 0, bf16 otherwise],
                 w_hh (H, 3H) bf16, b_ih (1, 3H) f32, b_hh (1, 3H) f32,
      head: w1 (T*H, H), b1 (1, H), w2 (H, H), b2 (1, H),
            w3 (H, H), b3 (1, H), w4 (H, 1), b4 (1, 1)   [all f32],
      outputs: out_ref (B, 1), last_ref (B, 1), c_ref (B, H),
      scratch: flat_sc VMEM (B, T*H) for the lane-dense head input.
    Gate column order matches PyTorch nn.GRU: (r, z, n), n = tanh(i_n + r*h_n)
    (loading a real PyTorch checkpoint would require transposing/permuting).
    """
    T = L - 1

    def kernel(*args):
        x_ref = args[0]
        p = 1
        layer_refs = []
        for _ in range(num_layers):
            layer_refs.append(args[p:p + 4])
            p += 4
        (w1_ref, b1_ref, w2_ref, b2_ref,
         w3_ref, b3_ref, w4_ref, b4_ref) = args[p:p + 8]
        p += 8
        out_ref, last_ref, c_ref = args[p], args[p + 1], args[p + 2]
        flat_sc = args[p + 3]

        xv = x_ref[...]                                    # (B, L)
        last_ref[...] = xv[:, L - 1:L]                     # x[:, -1:, -1]

        h_list = []
        for layer, (w_ih_ref, w_hh_ref, b_ih_ref, b_hh_ref) in enumerate(layer_refs):
            b_ih = b_ih_ref[...]
            b_hh = b_hh_ref[...]
            w_hh = w_hh_ref[...]                           # bf16, loop-invariant
            if layer == 0:
                # D_in == 1: outer product == broadcast multiply (VPU, no MXU).
                w0 = w_ih_ref[...]                         # (1, 3H) f32
                gi_list = [xv[:, t:t + 1] * w0 + b_ih for t in range(T)]
            else:
                # T independent off-critical-path matmuls on the prev layer's h.
                w_ih = w_ih_ref[...]                       # (H, 3H) bf16
                gi_list = [
                    jnp.dot(h_prev.astype(jnp.bfloat16), w_ih,
                            preferred_element_type=jnp.float32) + b_ih
                    for h_prev in h_list]

            h = None
            h_list = []
            for t in range(T):                             # fully unrolled
                gi = gi_list[t]                            # (B, 3H)
                if h is None:                              # h0 == 0 -> skip matmul
                    gh = b_hh                              # (1, 3H), broadcasts
                else:
                    gh = jnp.dot(h.astype(jnp.bfloat16), w_hh,
                                 preferred_element_type=jnp.float32) + b_hh
                # One sigmoid over the contiguous (r|z) 2H-lane block.
                rz = jax.nn.sigmoid(gi[:, 0:2 * H] + gh[:, 0:2 * H])
                r = rz[:, 0:H]
                z = rz[:, H:2 * H]
                n = jnp.tanh(gi[:, 2 * H:3 * H] + r * gh[:, 2 * H:3 * H])
                h = (1.0 - z) * n if h is None else (1.0 - z) * n + z * h
                h_list.append(h)

        # ---- gru_c1: pack h_t lane-dense, then a single K = T*H matmul.
        for t in range(T):
            flat_sc[:, t * H:(t + 1) * H] = h_list[t]
        flat = flat_sc[...]                                # (B, T*H)
        h1 = jnp.maximum(
            jnp.dot(flat, w1_ref[...], preferred_element_type=jnp.float32)
            + b1_ref[...], 0.0)
        c1 = jnp.dot(h1, w2_ref[...], preferred_element_type=jnp.float32) + b2_ref[...]
        # ---- normalize: x * rsqrt(sum(x**2, 1) + 1e-10)  (EUP rsqrt)
        c = c1 * lax.rsqrt(jnp.sum(c1 * c1, axis=1, keepdims=True) + 1e-10)
        c_ref[...] = c
        # ---- gru_c2
        h2 = jnp.maximum(
            jnp.dot(c, w3_ref[...], preferred_element_type=jnp.float32) + b3_ref[...],
            0.0)
        out_ref[...] = (jnp.dot(h2, w4_ref[...], preferred_element_type=jnp.float32)
                        + b4_ref[...])

    return kernel


def _make_lstm_kernel(num_layers, L, B, H):
    """Fused stacked-LSTM; writes the flattened (B, T*H) output lane-dense.

    Kernel args:
      x_ref (B, L) f32,
      per layer: w_ih (D_in, 4H) [f32 for layer 0, bf16 otherwise],
                 w_hh (H, 4H) bf16, b (1, 4H) f32 [b_ih + b_hh fused],
      outputs: out_ref (B, T*H), last_ref (B, 1).
    Gate column order is (i, f, o, g) so ONE sigmoid covers lanes [0:3H] and
    ONE tanh covers [3H:4H]  (PyTorch stores (i, f, g, o): permute + transpose
    if importing real checkpoints).
    """
    T = L - 1

    def kernel(*args):
        x_ref = args[0]
        p = 1
        layer_refs = []
        for _ in range(num_layers):
            layer_refs.append(args[p:p + 3])
            p += 3
        out_ref, last_ref = args[p], args[p + 1]

        xv = x_ref[...]                                    # (B, L)
        last_ref[...] = xv[:, L - 1:L]

        h_list = []
        for layer, (w_ih_ref, w_hh_ref, b_ref) in enumerate(layer_refs):
            b = b_ref[...]                                 # (1, 4H)
            w_hh = w_hh_ref[...]                           # bf16, loop-invariant
            if layer == 0:
                w0 = w_ih_ref[...]                         # (1, 4H) f32
                g_list = [xv[:, t:t + 1] * w0 + b for t in range(T)]
            else:
                w_ih = w_ih_ref[...]                       # (H, 4H) bf16
                g_list = [
                    jnp.dot(h_prev.astype(jnp.bfloat16), w_ih,
                            preferred_element_type=jnp.float32) + b
                    for h_prev in h_list]

            h = None
            c = None
            h_list = []
            for t in range(T):                             # fully unrolled
                g = g_list[t]                              # (B, 4H)
                if h is not None:
                    g = g + jnp.dot(h.astype(jnp.bfloat16), w_hh,
                                    preferred_element_type=jnp.float32)
                # Columns are (i, f, o, g): one sigmoid over 3H lanes, one tanh.
                s = jax.nn.sigmoid(g[:, 0:3 * H])
                i = s[:, 0:H]
                f = s[:, H:2 * H]
                o = s[:, 2 * H:3 * H]
                gg = jnp.tanh(g[:, 3 * H:4 * H])
                c = i * gg if c is None else f * c + i * gg
                h = o * jnp.tanh(c)
                h_list.append(h)

        # Lane-dense flattened output: flat[:, t*H:(t+1)*H] = h_t
        for t in range(T):
            out_ref[:, t * H:(t + 1) * H] = h_list[t]

    return kernel


# ----------------------------------------------------------------------------
# pallas_call wrappers (jit-compiled forwards)
# ----------------------------------------------------------------------------
def _build_gru_forward(rnn_params, head_params, num_layers, L, B, H):
    T = L - 1
    kernel = _make_gru_kernel(num_layers, L, B, H)
    flat_rnn = []
    for layer, (w_ih, w_hh, b_ih, b_hh) in enumerate(rnn_params):
        w_ih_k = w_ih if layer == 0 else w_ih.astype(jnp.bfloat16)
        flat_rnn += [w_ih_k, w_hh.astype(jnp.bfloat16), b_ih, b_hh]
    flat_rnn = tuple(flat_rnn)

    call = pl.pallas_call(
        kernel,
        out_shape=(jax.ShapeDtypeStruct((B, 1), jnp.float32),   # output
                   jax.ShapeDtypeStruct((B, 1), jnp.float32),   # x[:, -1:, -1]
                   jax.ShapeDtypeStruct((B, H), jnp.float32)),  # c
        scratch_shapes=[pltpu.VMEM((B, T * H), jnp.float32)],
    )

    @jax.jit
    def fwd(x):
        xs = x.astype(jnp.float32).reshape(B, L)          # (B, L, 1) -> (B, L)
        out, last, c = call(xs, *flat_rnn, *head_params)
        return out, last, c

    return fwd


def _build_lstm_forward(rnn_params, num_layers, L, B, H):
    T = L - 1
    kernel = _make_lstm_kernel(num_layers, L, B, H)
    flat_rnn = []
    for layer, (w_ih, w_hh, b) in enumerate(rnn_params):
        w_ih_k = w_ih if layer == 0 else w_ih.astype(jnp.bfloat16)
        flat_rnn += [w_ih_k, w_hh.astype(jnp.bfloat16), b]
    flat_rnn = tuple(flat_rnn)

    call = pl.pallas_call(
        kernel,
        out_shape=(jax.ShapeDtypeStruct((B, T * H), jnp.float32),
                   jax.ShapeDtypeStruct((B, 1), jnp.float32)),
    )

    @jax.jit
    def fwd(x):
        xs = x.astype(jnp.float32).reshape(B, L)
        out, last = call(xs, *flat_rnn)
        return out, last

    return fwd


# ----------------------------------------------------------------------------
# Deterministic parameter construction (fused-gate layout)
# ----------------------------------------------------------------------------
def _uniform(key, shape, fan_in):
    bound = 1.0 / math.sqrt(max(fan_in, 1))
    return jax.random.uniform(key, shape, jnp.float32, -bound, bound)


def _make_gru_layer(key, d_in, h):
    k = jax.random.split(key, 4)
    w_ih = _uniform(k[0], (d_in, 3 * h), h)    # columns ordered (r, z, n)
    w_hh = _uniform(k[1], (h, 3 * h), h)
    b_ih = _uniform(k[2], (1, 3 * h), h)
    b_hh = _uniform(k[3], (1, 3 * h), h)       # kept separate for the n-gate
    return (w_ih, w_hh, b_ih, b_hh)


def _make_lstm_layer(key, d_in, h):
    k = jax.random.split(key, 4)
    w_ih = _uniform(k[0], (d_in, 4 * h), h)    # columns ordered (i, f, o, g)
    w_hh = _uniform(k[1], (h, 4 * h), h)
    b = _uniform(k[2], (1, 4 * h), h) + _uniform(k[3], (1, 4 * h), h)
    return (w_ih, w_hh, b)


def _make_linear(key, d_in, d_out):
    kw, kb = jax.random.split(key)
    return _uniform(kw, (d_in, d_out), d_in), _uniform(kb, (1, d_out), d_in)


def _make_gru_head(key, T, h):
    k1, k2, k3, k4 = jax.random.split(key, 4)
    w1, b1 = _make_linear(k1, T * h, h)        # gru_c1 first layer
    w2, b2 = _make_linear(k2, h, h)            # gru_c1 second layer
    w3, b3 = _make_linear(k3, h, h)            # gru_c2 first layer
    w4, b4 = _make_linear(k4, h, 1)            # gru_c2 second layer
    return (w1, b1, w2, b2, w3, b3, w4, b4)


# ----------------------------------------------------------------------------
# Model
# ----------------------------------------------------------------------------
class PallasContrastiveModel:
    def __init__(self, model, data_shape, hidden_size, num_layers, seed=0):
        self.model = model
        batch_size, length = data_shape[0], data_shape[1]
        input_dim = 1
        self.batch_size, self.length, self.input_dim = batch_size, length, input_dim
        self.hidden_size, self.num_layers = hidden_size, num_layers
        T = length - 1

        key = jax.random.PRNGKey(seed)
        k_rnn, k_head = jax.random.split(key)

        if model == 'GRU':
            self.rnn_params = [
                _make_gru_layer(jax.random.fold_in(k_rnn, layer),
                                input_dim if layer == 0 else hidden_size, hidden_size)
                for layer in range(num_layers)]
            self.head_params = _make_gru_head(k_head, T, hidden_size)
            self._forward = _build_gru_forward(
                self.rnn_params, self.head_params, num_layers, length, batch_size,
                hidden_size)
        elif model == 'LSTM':
            self.rnn_params = [
                _make_lstm_layer(jax.random.fold_in(k_rnn, layer),
                                 input_dim if layer == 0 else hidden_size, hidden_size)
                for layer in range(num_layers)]
            self._forward = _build_lstm_forward(
                self.rnn_params, num_layers, length, batch_size, hidden_size)
        else:
            raise NotImplementedError(
                "Only 'GRU' and 'LSTM' branches are implemented in Pallas.")

    def forward(self, diff_before_result):
        return self._forward(diff_before_result)


# ----------------------------------------------------------------------------
# Pure-JAX references (for correctness checking)
# ----------------------------------------------------------------------------
def _gru_ref(x, rnn_params, head_params, H):
    B, L, _ = x.shape
    T = L - 1
    seq = x[:, :-1, :].astype(jnp.float32)
    for (w_ih, w_hh, b_ih, b_hh) in rnn_params:
        h = jnp.zeros((B, H), jnp.float32)
        outs = []
        for t in range(T):
            gi = seq[:, t, :] @ w_ih + b_ih
            gh = h @ w_hh + b_hh
            r = jax.nn.sigmoid(gi[:, :H] + gh[:, :H])
            z = jax.nn.sigmoid(gi[:, H:2 * H] + gh[:, H:2 * H])
            n = jnp.tanh(gi[:, 2 * H:] + r * gh[:, 2 * H:])
            h = (1.0 - z) * n + z * h
            outs.append(h)
        seq = jnp.stack(outs, axis=1)
    flat = seq.reshape(B, -1)
    w1, b1, w2, b2, w3, b3, w4, b4 = head_params
    h1 = jnp.maximum(flat @ w1 + b1, 0.0)
    c1 = h1 @ w2 + b2
    c = c1 / jnp.sqrt(jnp.sum(c1 * c1, axis=1, keepdims=True) + 1e-10)
    h2 = jnp.maximum(c @ w3 + b3, 0.0)
    return h2 @ w4 + b4, x[:, -1:, -1], c


def _lstm_ref(x, rnn_params, H):
    B, L, _ = x.shape
    T = L - 1
    seq = x[:, :-1, :].astype(jnp.float32)
    for (w_ih, w_hh, b) in rnn_params:
        h = jnp.zeros((B, H), jnp.float32)
        c = jnp.zeros((B, H), jnp.float32)
        outs = []
        for t in range(T):
            g = seq[:, t, :] @ w_ih + b + h @ w_hh
            i = jax.nn.sigmoid(g[:, :H])
            f = jax.nn.sigmoid(g[:, H:2 * H])
            o = jax.nn.sigmoid(g[:, 2 * H:3 * H])
            gg = jnp.tanh(g[:, 3 * H:])
            c = f * c + i * gg
            h = o * jnp.tanh(c)
            outs.append(h)
        seq = jnp.stack(outs, axis=1)
    return seq.reshape(B, -1), x[:, -1:, -1]


# ----------------------------------------------------------------------------
if __name__ == "__main__":
    B, L, H, NUM_LAYERS = 2, 8, 32, 2
    key = jax.random.PRNGKey(0)
    x = jax.random.normal(key, (B, L, 1), dtype=jnp.float32)

    # GRU branch: (output, last, c)
    gru_model = PallasContrastiveModel('GRU', (B, L, 1), H, NUM_LAYERS, seed=0)
    out_gru, last_gru, c_gru = gru_model.forward(x)
    jax.block_until_ready((out_gru, last_gru, c_gru))
    assert out_gru.shape == (B, 1)
    assert last_gru.shape == (B, 1)
    assert c_gru.shape == (B, H)
    r_out, r_last, r_c = _gru_ref(x, gru_model.rnn_params, gru_model.head_params, H)
    assert bool(jnp.allclose(out_gru, r_out, rtol=3e-2, atol=3e-2))
    assert bool(jnp.allclose(c_gru, r_c, rtol=3e-2, atol=3e-2))
    assert bool(jnp.allclose(last_gru, r_last))

    # LSTM branch: (output, last)
    lstm_model = PallasContrastiveModel('LSTM', (B, L, 1), H, NUM_LAYERS, seed=1)
    out_lstm, last_lstm = lstm_model.forward(x)
    jax.block_until_ready((out_lstm, last_lstm))
    assert out_lstm.shape == (B, (L - 1) * H)
    assert last_lstm.shape == (B, 1)
    l_out, l_last = _lstm_ref(x, lstm_model.rnn_params, H)
    assert bool(jnp.allclose(out_lstm, l_out, rtol=3e-2, atol=3e-2))
    assert bool(jnp.allclose(last_lstm, l_last))

    print("KERNEL_OK")
</pallas_src>

<mosaic_0001>
module attributes {stable_mosaic.version = 11 : i64} {
  func.func @kernel(%arg0: memref<2x8xf32, #tpu.memory_space<vmem>>, %arg1: memref<1x96xf32, #tpu.memory_space<vmem>>, %arg2: memref<32x96xbf16, #tpu.memory_space<vmem>>, %arg3: memref<1x96xf32, #tpu.memory_space<vmem>>, %arg4: memref<1x96xf32, #tpu.memory_space<vmem>>, %arg5: memref<32x96xbf16, #tpu.memory_space<vmem>>, %arg6: memref<32x96xbf16, #tpu.memory_space<vmem>>, %arg7: memref<1x96xf32, #tpu.memory_space<vmem>>, %arg8: memref<1x96xf32, #tpu.memory_space<vmem>>, %arg9: memref<224x32xf32, #tpu.memory_space<vmem>>, %arg10: memref<1x32xf32, #tpu.memory_space<vmem>>, %arg11: memref<32x32xf32, #tpu.memory_space<vmem>>, %arg12: memref<1x32xf32, #tpu.memory_space<vmem>>, %arg13: memref<32x32xf32, #tpu.memory_space<vmem>>, %arg14: memref<1x32xf32, #tpu.memory_space<vmem>>, %arg15: memref<32x1xf32, #tpu.memory_space<vmem>>, %arg16: memref<1x1xf32, #tpu.memory_space<vmem>>, %arg17: memref<2x1xf32, #tpu.memory_space<vmem>>, %arg18: memref<2x1xf32, #tpu.memory_space<vmem>>, %arg19: memref<2x32xf32, #tpu.memory_space<vmem>>, %arg20: memref<2x224xf32, #tpu.memory_space<vmem>>) attributes {dimension_semantics = [], scalar_prefetch = 0 : i64, scratch_operands = 1 : i64, tpu.core_type = #tpu.core_type<tc>} {
    %c0 = arith.constant 0 : index
    %c0_0 = arith.constant 0 : index
    %0 = vector.load %arg0[%c0, %c0_0] : memref<2x8xf32, #tpu.memory_space<vmem>>, vector<2x8xf32>
    %1 = vector.extract_strided_slice %0 {offsets = [0, 7], sizes = [2, 1], strides = [1, 1]} : vector<2x8xf32> to vector<2x1xf32>
    %c0_1 = arith.constant 0 : index
    %c0_2 = arith.constant 0 : index
    %2 = vector.load %arg18[%c0_1, %c0_2] : memref<2x1xf32, #tpu.memory_space<vmem>>, vector<2x1xf32>
    tpu.vector_store %arg18[%c0_1, %c0_2], %1 {strides = array<i32>} : memref<2x1xf32, #tpu.memory_space<vmem>>, vector<2x1xf32>,
    %c0_3 = arith.constant 0 : index
    %c0_4 = arith.constant 0 : index
    %3 = vector.load %arg3[%c0_3, %c0_4] : memref<1x96xf32, #tpu.memory_space<vmem>>, vector<1x96xf32>
    %c0_5 = arith.constant 0 : index
    %c0_6 = arith.constant 0 : index
    %4 = vector.load %arg4[%c0_5, %c0_6] : memref<1x96xf32, #tpu.memory_space<vmem>>, vector<1x96xf32>
    %c0_7 = arith.constant 0 : index
    %c0_8 = arith.constant 0 : index
    %5 = vector.load %arg2[%c0_7, %c0_8] : memref<32x96xbf16, #tpu.memory_space<vmem>>, vector<32x96xbf16>
    %c0_9 = arith.constant 0 : index
    %c0_10 = arith.constant 0 : index
    %6 = vector.load %arg1[%c0_9, %c0_10] : memref<1x96xf32, #tpu.memory_space<vmem>>, vector<1x96xf32>
    %7 = vector.extract_strided_slice %0 {offsets = [0, 0], sizes = [2, 1], strides = [1, 1]} : vector<2x8xf32> to vector<2x1xf32>
    %8 = vector.broadcast %7 : vector<2x1xf32> to vector<2x96xf32>
    %9 = vector.broadcast %6 : vector<1x96xf32> to vector<2x96xf32>
    %10 = arith.mulf %8, %9 : vector<2x96xf32>
    %11 = vector.broadcast %3 : vector<1x96xf32> to vector<2x96xf32>
    %12 = arith.addf %10, %11 : vector<2x96xf32>
    %13 = vector.extract_strided_slice %0 {offsets = [0, 1], sizes = [2, 1], strides = [1, 1]} : vector<2x8xf32> to vector<2x1xf32>
    %14 = vector.broadcast %13 : vector<2x1xf32> to vector<2x96xf32>
    %15 = vector.broadcast %6 : vector<1x96xf32> to vector<2x96xf32>
    %16 = arith.mulf %14, %15 : vector<2x96xf32>
    %17 = vector.broadcast %3 : vector<1x96xf32> to vector<2x96xf32>
    %18 = arith.addf %16, %17 : vector<2x96xf32>
    %19 = vector.extract_strided_slice %0 {offsets = [0, 2], sizes = [2, 1], strides = [1, 1]} : vector<2x8xf32> to vector<2x1xf32>
    %20 = vector.broadcast %19 : vector<2x1xf32> to vector<2x96xf32>
    %21 = vector.broadcast %6 : vector<1x96xf32> to vector<2x96xf32>
    %22 = arith.mulf %20, %21 : vector<2x96xf32>
    %23 = vector.broadcast %3 : vector<1x96xf32> to vector<2x96xf32>
    %24 = arith.addf %22, %23 : vector<2x96xf32>
    %25 = vector.extract_strided_slice %0 {offsets = [0, 3], sizes = [2, 1], strides = [1, 1]} : vector<2x8xf32> to vector<2x1xf32>
    %26 = vector.broadcast %25 : vector<2x1xf32> to vector<2x96xf32>
    %27 = vector.broadcast %6 : vector<1x96xf32> to vector<2x96xf32>
    %28 = arith.mulf %26, %27 : vector<2x96xf32>
    %29 = vector.broadcast %3 : vector<1x96xf32> to vector<2x96xf32>
    %30 = arith.addf %28, %29 : vector<2x96xf32>
    %31 = vector.extract_strided_slice %0 {offsets = [0, 4], sizes = [2, 1], strides = [1, 1]} : vector<2x8xf32> to vector<2x1xf32>
    %32 = vector.broadcast %31 : vector<2x1xf32> to vector<2x96xf32>
    %33 = vector.broadcast %6 : vector<1x96xf32> to vector<2x96xf32>
    %34 = arith.mulf %32, %33 : vector<2x96xf32>
    %35 = vector.broadcast %3 : vector<1x96xf32> to vector<2x96xf32>
    %36 = arith.addf %34, %35 : vector<2x96xf32>
    %37 = vector.extract_strided_slice %0 {offsets = [0, 5], sizes = [2, 1], strides = [1, 1]} : vector<2x8xf32> to vector<2x1xf32>
    %38 = vector.broadcast %37 : vector<2x1xf32> to vector<2x96xf32>
    %39 = vector.broadcast %6 : vector<1x96xf32> to vector<2x96xf32>
    %40 = arith.mulf %38, %39 : vector<2x96xf32>
    %41 = vector.broadcast %3 : vector<1x96xf32> to vector<2x96xf32>
    %42 = arith.addf %40, %41 : vector<2x96xf32>
    %43 = vector.extract_strided_slice %0 {offsets = [0, 6], sizes = [2, 1], strides = [1, 1]} : vector<2x8xf32> to vector<2x1xf32>
    %44 = vector.broadcast %43 : vector<2x1xf32> to vector<2x96xf32>
    %45 = vector.broadcast %6 : vector<1x96xf32> to vector<2x96xf32>
    %46 = arith.mulf %44, %45 : vector<2x96xf32>
    %47 = vector.broadcast %3 : vector<1x96xf32> to vector<2x96xf32>
    %48 = arith.addf %46, %47 : vector<2x96xf32>
    %49 = vector.extract_strided_slice %12 {offsets = [0, 0], sizes = [2, 64], strides = [1, 1]} : vector<2x96xf32> to vector<2x64xf32>
    %50 = vector.extract_strided_slice %4 {offsets = [0, 0], sizes = [1, 64], strides = [1, 1]} : vector<1x96xf32> to vector<1x64xf32>
    %51 = vector.broadcast %50 : vector<1x64xf32> to vector<2x64xf32>
    %52 = arith.addf %49, %51 : vector<2x64xf32>
    %53 = arith.negf %52 : vector<2x64xf32>
    %54 = math.exp %53 : vector<2x64xf32>
    %cst = arith.constant 1.000000e+00 : f32
    %55 = vector.broadcast %cst : f32 to vector<2x64xf32>
    %56 = arith.addf %55, %54 : vector<2x64xf32>
    %57 = arith.divf %55, %56 : vector<2x64xf32>
    %58 = vector.extract_strided_slice %57 {offsets = [0, 0], sizes = [2, 32], strides = [1, 1]} : vector<2x64xf32> to vector<2x32xf32>
    %59 = vector.extract_strided_slice %57 {offsets = [0, 32], sizes = [2, 32], strides = [1, 1]} : vector<2x64xf32> to vector<2x32xf32>
    %60 = vector.extract_strided_slice %12 {offsets = [0, 64], sizes = [2, 32], strides = [1, 1]} : vector<2x96xf32> to vector<2x32xf32>
    %61 = vector.extract_strided_slice %4 {offsets = [0, 64], sizes = [1, 32], strides = [1, 1]} : vector<1x96xf32> to vector<1x32xf32>
    %62 = vector.broadcast %61 : vector<1x32xf32> to vector<2x32xf32>
    %63 = arith.mulf %58, %62 : vector<2x32xf32>
    %64 = arith.addf %60, %63 : vector<2x32xf32>
    %65 = math.tanh %64 : vector<2x32xf32>
    %cst_11 = arith.constant 1.000000e+00 : f32
    %66 = vector.broadcast %cst_11 : f32 to vector<2x32xf32>
    %67 = arith.subf %66, %59 : vector<2x32xf32>
    %68 = arith.mulf %67, %65 : vector<2x32xf32>
    %69 = arith.truncf %68 : vector<2x32xf32> to vector<2x32xbf16>
    %cst_12 = arith.constant dense<0.000000e+00> : vector<2x96xf32>
    %70 = tpu.matmul %69, %5, %cst_12 {dimension_numbers = #tpu.dot_dimension_numbers<[1], [0], [0], [1], [0, 0, 1, 1], [], []>} : vector<2x32xbf16>, vector<32x96xbf16>, vector<2x96xf32> -> vector<2x96xf32>
    %71 = vector.broadcast %4 : vector<1x96xf32> to vector<2x96xf32>
    %72 = arith.addf %70, %71 : vector<2x96xf32>
    %73 = vector.extract_strided_slice %18 {offsets = [0, 0], sizes = [2, 64], strides = [1, 1]} : vector<2x96xf32> to vector<2x64xf32>
    %74 = vector.extract_strided_slice %72 {offsets = [0, 0], sizes = [2, 64], strides = [1, 1]} : vector<2x96xf32> to vector<2x64xf32>
    %75 = arith.addf %73, %74 : vector<2x64xf32>
    %76 = arith.negf %75 : vector<2x64xf32>
    %77 = math.exp %76 : vector<2x64xf32>
    %cst_13 = arith.constant 1.000000e+00 : f32
    %78 = vector.broadcast %cst_13 : f32 to vector<2x64xf32>
    %79 = arith.addf %78, %77 : vector<2x64xf32>
    %80 = arith.divf %78, %79 : vector<2x64xf32>
    %81 = vector.extract_strided_slice %80 {offsets = [0, 0], sizes = [2, 32], strides = [1, 1]} : vector<2x64xf32> to vector<2x32xf32>
    %82 = vector.extract_strided_slice %80 {offsets = [0, 32], sizes = [2, 32], strides = [1, 1]} : vector<2x64xf32> to vector<2x32xf32>
    %83 = vector.extract_strided_slice %18 {offsets = [0, 64], sizes = [2, 32], strides = [1, 1]} : vector<2x96xf32> to vector<2x32xf32>
    %84 = vector.extract_strided_slice %72 {offsets = [0, 64], sizes = [2, 32], strides = [1, 1]} : vector<2x96xf32> to vector<2x32xf32>
    %85 = arith.mulf %81, %84 : vector<2x32xf32>
    %86 = arith.addf %83, %85 : vector<2x32xf32>
    %87 = math.tanh %86 : vector<2x32xf32>
    %cst_14 = arith.constant 1.000000e+00 : f32
    %88 = vector.broadcast %cst_14 : f32 to vector<2x32xf32>
    %89 = arith.subf %88, %82 : vector<2x32xf32>
    %90 = arith.mulf %89, %87 : vector<2x32xf32>
    %91 = arith.mulf %82, %68 : vector<2x32xf32>
    %92 = arith.addf %90, %91 : vector<2x32xf32>
    %93 = arith.truncf %92 : vector<2x32xf32> to vector<2x32xbf16>
    %cst_15 = arith.constant dense<0.000000e+00> : vector<2x96xf32>
    %94 = tpu.matmul %93, %5, %cst_15 {dimension_numbers = #tpu.dot_dimension_numbers<[1], [0], [0], [1], [0, 0, 1, 1], [], []>} : vector<2x32xbf16>, vector<32x96xbf16>, vector<2x96xf32> -> vector<2x96xf32>
    %95 = vector.broadcast %4 : vector<1x96xf32> to vector<2x96xf32>
    %96 = arith.addf %94, %95 : vector<2x96xf32>
    %97 = vector.extract_strided_slice %24 {offsets = [0, 0], sizes = [2, 64], strides = [1, 1]} : vector<2x96xf32> to vector<2x64xf32>
    %98 = vector.extract_strided_slice %96 {offsets = [0, 0], sizes = [2, 64], strides = [1, 1]} : vector<2x96xf32> to vector<2x64xf32>
    %99 = arith.addf %97, %98 : vector<2x64xf32>
    %100 = arith.negf %99 : vector<2x64xf32>
    %101 = math.exp %100 : vector<2x64xf32>
    %cst_16 = arith.constant 1.000000e+00 : f32
    %102 = vector.broadcast %cst_16 : f32 to vector<2x64xf32>
    %103 = arith.addf %102, %101 : vector<2x64xf32>
    %104 = arith.divf %102, %103 : vector<2x64xf32>
    %105 = vector.extract_strided_slice %104 {offsets = [0, 0], sizes = [2, 32], strides = [1, 1]} : vector<2x64xf32> to vector<2x32xf32>
    %106 = vector.extract_strided_slice %104 {offsets = [0, 32], sizes = [2, 32], strides = [1, 1]} : vector<2x64xf32> to vector<2x32xf32>
    %107 = vector.extract_strided_slice %24 {offsets = [0, 64], sizes = [2, 32], strides = [1, 1]} : vector<2x96xf32> to vector<2x32xf32>
    %108 = vector.extract_strided_slice %96 {offsets = [0, 64], sizes = [2, 32], strides = [1, 1]} : vector<2x96xf32> to vector<2x32xf32>
    %109 = arith.mulf %105, %108 : vector<2x32xf32>
    %110 = arith.addf %107, %109 : vector<2x32xf32>
    %111 = math.tanh %110 : vector<2x32xf32>
    %cst_17 = arith.constant 1.000000e+00 : f32
    %112 = vector.broadcast %cst_17 : f32 to vector<2x32xf32>
    %113 = arith.subf %112, %106 : vector<2x32xf32>
    %114 = arith.mulf %113, %111 : vector<2x32xf32>
    %115 = arith.mulf %106, %92 : vector<2x32xf32>
    %116 = arith.addf %114, %115 : vector<2x32xf32>
    %117 = arith.truncf %116 : vector<2x32xf32> to vector<2x32xbf16>
    %cst_18 = arith.constant dense<0.000000e+00> : vector<2x96xf32>
    %118 = tpu.matmul %117, %5, %cst_18 {dimension_numbers = #tpu.dot_dimension_numbers<[1], [0], [0], [1], [0, 0, 1, 1], [], []>} : vector<2x32xbf16>, vector<32x96xbf16>, vector<2x96xf32> -> vector<2x96xf32>
    %119 = vector.broadcast %4 : vector<1x96xf32> to vector<2x96xf32>
    %120 = arith.addf %118, %119 : vector<2x96xf32>
    %121 = vector.extract_strided_slice %30 {offsets = [0, 0], sizes = [2, 64], strides = [1, 1]} : vector<2x96xf32> to vector<2x64xf32>
    %122 = vector.extract_strided_slice %120 {offsets = [0, 0], sizes = [2, 64], strides = [1, 1]} : vector<2x96xf32> to vector<2x64xf32>
    %123 = arith.addf %121, %122 : vector<2x64xf32>
    %124 = arith.negf %123 : vector<2x64xf32>
    %125 = math.exp %124 : vector<2x64xf32>
    %cst_19 = arith.constant 1.000000e+00 : f32
    %126 = vector.broadcast %cst_19 : f32 to vector<2x64xf32>
    %127 = arith.addf %126, %125 : vector<2x64xf32>
    %128 = arith.divf %126, %127 : vector<2x64xf32>
    %129 = vector.extract_strided_slice %128 {offsets = [0, 0], sizes = [2, 32], strides = [1, 1]} : vector<2x64xf32> to vector<2x32xf32>
    %130 = vector.extract_strided_slice %128 {offsets = [0, 32], sizes = [2, 32], strides = [1, 1]} : vector<2x64xf32> to vector<2x32xf32>
    %131 = vector.extract_strided_slice %30 {offsets = [0, 64], sizes = [2, 32], strides = [1, 1]} : vector<2x96xf32> to vector<2x32xf32>
    %132 = vector.extract_strided_slice %120 {offsets = [0, 64], sizes = [2, 32], strides = [1, 1]} : vector<2x96xf32> to vector<2x32xf32>
    %133 = arith.mulf %129, %132 : vector<2x32xf32>
    %134 = arith.addf %131, %133 : vector<2x32xf32>
    %135 = math.tanh %134 : vector<2x32xf32>
    %cst_20 = arith.constant 1.000000e+00 : f32
    %136 = vector.broadcast %cst_20 : f32 to vector<2x32xf32>
    %137 = arith.subf %136, %130 : vector<2x32xf32>
    %138 = arith.mulf %137, %135 : vector<2x32xf32>
    %139 = arith.mulf %130, %116 : vector<2x32xf32>
    %140 = arith.addf %138, %139 : vector<2x32xf32>
    %141 = arith.truncf %140 : vector<2x32xf32> to vector<2x32xbf16>
    %cst_21 = arith.constant dense<0.000000e+00> : vector<2x96xf32>
    %142 = tpu.matmul %141, %5, %cst_21 {dimension_numbers = #tpu.dot_dimension_numbers<[1], [0], [0], [1], [0, 0, 1, 1], [], []>} : vector<2x32xbf16>, vector<32x96xbf16>, vector<2x96xf32> -> vector<2x96xf32>
    %143 = vector.broadcast %4 : vector<1x96xf32> to vector<2x96xf32>
    %144 = arith.addf %142, %143 : vector<2x96xf32>
    %145 = vector.extract_strided_slice %36 {offsets = [0, 0], sizes = [2, 64], strides = [1, 1]} : vector<2x96xf32> to vector<2x64xf32>
    %146 = vector.extract_strided_slice %144 {offsets = [0, 0], sizes = [2, 64], strides = [1, 1]} : vector<2x96xf32> to vector<2x64xf32>
    %147 = arith.addf %145, %146 : vector<2x64xf32>
    %148 = arith.negf %147 : vector<2x64xf32>
    %149 = math.exp %148 : vector<2x64xf32>
    %cst_22 = arith.constant 1.000000e+00 : f32
    %150 = vector.broadcast %cst_22 : f32 to vector<2x64xf32>
    %151 = arith.addf %150, %149 : vector<2x64xf32>
    %152 = arith.divf %150, %151 : vector<2x64xf32>
    %153 = vector.extract_strided_slice %152 {offsets = [0, 0], sizes = [2, 32], strides = [1, 1]} : vector<2x64xf32> to vector<2x32xf32>
    %154 = vector.extract_strided_slice %152 {offsets = [0, 32], sizes = [2, 32], strides = [1, 1]} : vector<2x64xf32> to vector<2x32xf32>
    %155 = vector.extract_strided_slice %36 {offsets = [0, 64], sizes = [2, 32], strides = [1, 1]} : vector<2x96xf32> to vector<2x32xf32>
    %156 = vector.extract_strided_slice %144 {offsets = [0, 64], sizes = [2, 32], strides = [1, 1]} : vector<2x96xf32> to vector<2x32xf32>
    %157 = arith.mulf %153, %156 : vector<2x32xf32>
    %158 = arith.addf %155, %157 : vector<2x32xf32>
    %159 = math.tanh %158 : vector<2x32xf32>
    %cst_23 = arith.constant 1.000000e+00 : f32
    %160 = vector.broadcast %cst_23 : f32 to vector<2x32xf32>
    %161 = arith.subf %160, %154 : vector<2x32xf32>
    %162 = arith.mulf %161, %159 : vector<2x32xf32>
    %163 = arith.mulf %154, %140 : vector<2x32xf32>
    %164 = arith.addf %162, %163 : vector<2x32xf32>
    %165 = arith.truncf %164 : vector<2x32xf32> to vector<2x32xbf16>
    %cst_24 = arith.constant dense<0.000000e+00> : vector<2x96xf32>
    %166 = tpu.matmul %165, %5, %cst_24 {dimension_numbers = #tpu.dot_dimension_numbers<[1], [0], [0], [1], [0, 0, 1, 1], [], []>} : vector<2x32xbf16>, vector<32x96xbf16>, vector<2x96xf32> -> vector<2x96xf32>
    %167 = vector.broadcast %4 : vector<1x96xf32> to vector<2x96xf32>
    %168 = arith.addf %166, %167 : vector<2x96xf32>
    %169 = vector.extract_strided_slice %42 {offsets = [0, 0], sizes = [2, 64], strides = [1, 1]} : vector<2x96xf32> to vector<2x64xf32>
    %170 = vector.extract_strided_slice %168 {offsets = [0, 0], sizes = [2, 64], strides = [1, 1]} : vector<2x96xf32> to vector<2x64xf32>
    %171 = arith.addf %169, %170 : vector<2x64xf32>
    %172 = arith.negf %171 : vector<2x64xf32>
    %173 = math.exp %172 : vector<2x64xf32>
    %cst_25 = arith.constant 1.000000e+00 : f32
    %174 = vector.broadcast %cst_25 : f32 to vector<2x64xf32>
    %175 = arith.addf %174, %173 : vector<2x64xf32>
    %176 = arith.divf %174, %175 : vector<2x64xf32>
    %177 = vector.extract_strided_slice %176 {offsets = [0, 0], sizes = [2, 32], strides = [1, 1]} : vector<2x64xf32> to vector<2x32xf32>
    %178 = vector.extract_strided_slice %176 {offsets = [0, 32], sizes = [2, 32], strides = [1, 1]} : vector<2x64xf32> to vector<2x32xf32>
    %179 = vector.extract_strided_slice %42 {offsets = [0, 64], sizes = [2, 32], strides = [1, 1]} : vector<2x96xf32> to vector<2x32xf32>
    %180 = vector.extract_strided_slice %168 {offsets = [0, 64], sizes = [2, 32], strides = [1, 1]} : vector<2x96xf32> to vector<2x32xf32>
    %181 = arith.mulf %177, %180 : vector<2x32xf32>
    %182 = arith.addf %179, %181 : vector<2x32xf32>
    %183 = math.tanh %182 : vector<2x32xf32>
    %cst_26 = arith.constant 1.000000e+00 : f32
    %184 = vector.broadcast %cst_26 : f32 to vector<2x32xf32>
    %185 = arith.subf %184, %178 : vector<2x32xf32>
    %186 = arith.mulf %185, %183 : vector<2x32xf32>
    %187 = arith.mulf %178, %164 : vector<2x32xf32>
    %188 = arith.addf %186, %187 : vector<2x32xf32>
    %189 = arith.truncf %188 : vector<2x32xf32> to vector<2x32xbf16>
    %cst_27 = arith.constant dense<0.000000e+00> : vector<2x96xf32>
    %190 = tpu.matmul %189, %5, %cst_27 {dimension_numbers = #tpu.dot_dimension_numbers<[1], [0], [0], [1], [0, 0, 1, 1], [], []>} : vector<2x32xbf16>, vector<32x96xbf16>, vector<2x96xf32> -> vector<2x96xf32>
    %191 = vector.broadcast %4 : vector<1x96xf32> to vector<2x96xf32>
    %192 = arith.addf %190, %191 : vector<2x96xf32>
    %193 = vector.extract_strided_slice %48 {offsets = [0, 0], sizes = [2, 64], strides = [1, 1]} : vector<2x96xf32> to vector<2x64xf32>
    %194 = vector.extract_strided_slice %192 {offsets = [0, 0], sizes = [2, 64], strides = [1, 1]} : vector<2x96xf32> to vector<2x64xf32>
    %195 = arith.addf %193, %194 : vector<2x64xf32>
    %196 = arith.negf %195 : vector<2x64xf32>
    %197 = math.exp %196 : vector<2x64xf32>
    %cst_28 = arith.constant 1.000000e+00 : f32
    %198 = vector.broadcast %cst_28 : f32 to vector<2x64xf32>
    %199 = arith.addf %198, %197 : vector<2x64xf32>
    %200 = arith.divf %198, %199 : vector<2x64xf32>
    %201 = vector.extract_strided_slice %200 {offsets = [0, 0], sizes = [2, 32], strides = [1, 1]} : vector<2x64xf32> to vector<2x32xf32>
    %202 = vector.extract_strided_slice %200 {offsets = [0, 32], sizes = [2, 32], strides = [1, 1]} : vector<2x64xf32> to vector<2x32xf32>
    %203 = vector.extract_strided_slice %48 {offsets = [0, 64], sizes = [2, 32], strides = [1, 1]} : vector<2x96xf32> to vector<2x32xf32>
    %204 = vector.extract_strided_slice %192 {offsets = [0, 64], sizes = [2, 32], strides = [1, 1]} : vector<2x96xf32> to vector<2x32xf32>
    %205 = arith.mulf %201, %204 : vector<2x32xf32>
    %206 = arith.addf %203, %205 : vector<2x32xf32>
    %207 = math.tanh %206 : vector<2x32xf32>
    %cst_29 = arith.constant 1.000000e+00 : f32
    %208 = vector.broadcast %cst_29 : f32 to vector<2x32xf32>
    %209 = arith.subf %208, %202 : vector<2x32xf32>
    %210 = arith.mulf %209, %207 : vector<2x32xf32>
    %211 = arith.mulf %202, %188 : vector<2x32xf32>
    %212 = arith.addf %210, %211 : vector<2x32xf32>
    %c0_30 = arith.constant 0 : index
    %c0_31 = arith.constant 0 : index
    %213 = vector.load %arg7[%c0_30, %c0_31] : memref<1x96xf32, #tpu.memory_space<vmem>>, vector<1x96xf32>
    %c0_32 = arith.constant 0 : index
    %c0_33 = arith.constant 0 : index
    %214 = vector.load %arg8[%c0_32, %c0_33] : memref<1x96xf32, #tpu.memory_space<vmem>>, vector<1x96xf32>
    %c0_34 = arith.constant 0 : index
    %c0_35 = arith.constant 0 : index
    %215 = vector.load %arg6[%c0_34, %c0_35] : memref<32x96xbf16, #tpu.memory_space<vmem>>, vector<32x96xbf16>
    %c0_36 = arith.constant 0 : index
    %c0_37 = arith.constant 0 : index
    %216 = vector.load %arg5[%c0_36, %c0_37] : memref<32x96xbf16, #tpu.memory_space<vmem>>, vector<32x96xbf16>
    %217 = arith.truncf %68 : vector<2x32xf32> to vector<2x32xbf16>
    %cst_38 = arith.constant dense<0.000000e+00> : vector<2x96xf32>
    %218 = tpu.matmul %217, %216, %cst_38 {dimension_numbers = #tpu.dot_dimension_numbers<[1], [0], [0], [1], [0, 0, 1, 1], [], []>} : vector<2x32xbf16>, vector<32x96xbf16>, vector<2x96xf32> -> vector<2x96xf32>
    %219 = vector.broadcast %213 : vector<1x96xf32> to vector<2x96xf32>
    %220 = arith.addf %218, %219 : vector<2x96xf32>
    %221 = arith.truncf %92 : vector<2x32xf32> to vector<2x32xbf16>
    %cst_39 = arith.constant dense<0.000000e+00> : vector<2x96xf32>
    %222 = tpu.matmul %221, %216, %cst_39 {dimension_numbers = #tpu.dot_dimension_numbers<[1], [0], [0], [1], [0, 0, 1, 1], [], []>} : vector<2x32xbf16>, vector<32x96xbf16>, vector<2x96xf32> -> vector<2x96xf32>
    %223 = vector.broadcast %213 : vector<1x96xf32> to vector<2x96xf32>
    %224 = arith.addf %222, %223 : vector<2x96xf32>
    %225 = arith.truncf %116 : vector<2x32xf32> to vector<2x32xbf16>
    %cst_40 = arith.constant dense<0.000000e+00> : vector<2x96xf32>
    %226 = tpu.matmul %225, %216, %cst_40 {dimension_numbers = #tpu.dot_dimension_numbers<[1], [0], [0], [1], [0, 0, 1, 1], [], []>} : vector<2x32xbf16>, vector<32x96xbf16>, vector<2x96xf32> -> vector<2x96xf32>
    %227 = vector.broadcast %213 : vector<1x96xf32> to vector<2x96xf32>
    %228 = arith.addf %226, %227 : vector<2x96xf32>
    %229 = arith.truncf %140 : vector<2x32xf32> to vector<2x32xbf16>
    %cst_41 = arith.constant dense<0.000000e+00> : vector<2x96xf32>
    %230 = tpu.matmul %229, %216, %cst_41 {dimension_numbers = #tpu.dot_dimension_numbers<[1], [0], [0], [1], [0, 0, 1, 1], [], []>} : vector<2x32xbf16>, vector<32x96xbf16>, vector<2x96xf32> -> vector<2x96xf32>
    %231 = vector.broadcast %213 : vector<1x96xf32> to vector<2x96xf32>
    %232 = arith.addf %230, %231 : vector<2x96xf32>
    %233 = arith.truncf %164 : vector<2x32xf32> to vector<2x32xbf16>
    %cst_42 = arith.constant dense<0.000000e+00> : vector<2x96xf32>
    %234 = tpu.matmul %233, %216, %cst_42 {dimension_numbers = #tpu.dot_dimension_numbers<[1], [0], [0], [1], [0, 0, 1, 1], [], []>} : vector<2x32xbf16>, vector<32x96xbf16>, vector<2x96xf32> -> vector<2x96xf32>
    %235 = vector.broadcast %213 : vector<1x96xf32> to vector<2x96xf32>
    %236 = arith.addf %234, %235 : vector<2x96xf32>
    %237 = arith.truncf %188 : vector<2x32xf32> to vector<2x32xbf16>
    %cst_43 = arith.constant dense<0.000000e+00> : vector<2x96xf32>
    %238 = tpu.matmul %237, %216, %cst_43 {dimension_numbers = #tpu.dot_dimension_numbers<[1], [0], [0], [1], [0, 0, 1, 1], [], []>} : vector<2x32xbf16>, vector<32x96xbf16>, vector<2x96xf32> -> vector<2x96xf32>
    %239 = vector.broadcast %213 : vector<1x96xf32> to vector<2x96xf32>
    %240 = arith.addf %238, %239 : vector<2x96xf32>
    %241 = arith.truncf %212 : vector<2x32xf32> to vector<2x32xbf16>
    %cst_44 = arith.constant dense<0.000000e+00> : vector<2x96xf32>
    %242 = tpu.matmul %241, %216, %cst_44 {dimension_numbers = #tpu.dot_dimension_numbers<[1], [0], [0], [1], [0, 0, 1, 1], [], []>} : vector<2x32xbf16>, vector<32x96xbf16>, vector<2x96xf32> -> vector<2x96xf32>
    %243 = vector.broadcast %213 : vector<1x96xf32> to vector<2x96xf32>
    %244 = arith.addf %242, %243 : vector<2x96xf32>
    %245 = vector.extract_strided_slice %220 {offsets = [0, 0], sizes = [2, 64], strides = [1, 1]} : vector<2x96xf32> to vector<2x64xf32>
    %246 = vector.extract_strided_slice %214 {offsets = [0, 0], sizes = [1, 64], strides = [1, 1]} : vector<1x96xf32> to vector<1x64xf32>
    %247 = vector.broadcast %246 : vector<1x64xf32> to vector<2x64xf32>
    %248 = arith.addf %245, %247 : vector<2x64xf32>
    %249 = arith.negf %248 : vector<2x64xf32>
    %250 = math.exp %249 : vector<2x64xf32>
    %cst_45 = arith.constant 1.000000e+00 : f32
    %251 = vector.broadcast %cst_45 : f32 to vector<2x64xf32>
    %252 = arith.addf %251, %250 : vector<2x64xf32>
    %253 = arith.divf %251, %252 : vector<2x64xf32>
    %254 = vector.extract_strided_slice %253 {offsets = [0, 0], sizes = [2, 32], strides = [1, 1]} : vector<2x64xf32> to vector<2x32xf32>
    %255 = vector.extract_strided_slice %253 {offsets = [0, 32], sizes = [2, 32], strides = [1, 1]} : vector<2x64xf32> to vector<2x32xf32>
    %256 = vector.extract_strided_slice %220 {offsets = [0, 64], sizes = [2, 32], strides = [1, 1]} : vector<2x96xf32> to vector<2x32xf32>
    %257 = vector.extract_strided_slice %214 {offsets = [0, 64], sizes = [1, 32], strides = [1, 1]} : vector<1x96xf32> to vector<1x32xf32>
    %258 = vector.broadcast %257 : vector<1x32xf32> to vector<2x32xf32>
    %259 = arith.mulf %254, %258 : vector<2x32xf32>
    %260 = arith.addf %256, %259 : vector<2x32xf32>
    %261 = math.tanh %260 : vector<2x32xf32>
    %cst_46 = arith.constant 1.000000e+00 : f32
    %262 = vector.broadcast %cst_46 : f32 to vector<2x32xf32>
    %263 = arith.subf %262, %255 : vector<2x32xf32>
    %264 = arith.mulf %263, %261 : vector<2x32xf32>
    %265 = arith.truncf %264 : vector<2x32xf32> to vector<2x32xbf16>
    %cst_47 = arith.constant dense<0.000000e+00> : vector<2x96xf32>
    %266 = tpu.matmul %265, %215, %cst_47 {dimension_numbers = #tpu.dot_dimension_numbers<[1], [0], [0], [1], [0, 0, 1, 1], [], []>} : vector<2x32xbf16>, vector<32x96xbf16>, vector<2x96xf32> -> vector<2x96xf32>
    %267 = vector.broadcast %214 : vector<1x96xf32> to vector<2x96xf32>
    %268 = arith.addf %266, %267 : vector<2x96xf32>
    %269 = vector.extract_strided_slice %224 {offsets = [0, 0], sizes = [2, 64], strides = [1, 1]} : vector<2x96xf32> to vector<2x64xf32>
    %270 = vector.extract_strided_slice %268 {offsets = [0, 0], sizes = [2, 64], strides = [1, 1]} : vector<2x96xf32> to vector<2x64xf32>
    %271 = arith.addf %269, %270 : vector<2x64xf32>
    %272 = arith.negf %271 : vector<2x64xf32>
    %273 = math.exp %272 : vector<2x64xf32>
    %cst_48 = arith.constant 1.000000e+00 : f32
    %274 = vector.broadcast %cst_48 : f32 to vector<2x64xf32>
    %275 = arith.addf %274, %273 : vector<2x64xf32>
    %276 = arith.divf %274, %275 : vector<2x64xf32>
    %277 = vector.extract_strided_slice %276 {offsets = [0, 0], sizes = [2, 32], strides = [1, 1]} : vector<2x64xf32> to vector<2x32xf32>
    %278 = vector.extract_strided_slice %276 {offsets = [0, 32], sizes = [2, 32], strides = [1, 1]} : vector<2x64xf32> to vector<2x32xf32>
    %279 = vector.extract_strided_slice %224 {offsets = [0, 64], sizes = [2, 32], strides = [1, 1]} : vector<2x96xf32> to vector<2x32xf32>
    %280 = vector.extract_strided_slice %268 {offsets = [0, 64], sizes = [2, 32], strides = [1, 1]} : vector<2x96xf32> to vector<2x32xf32>
    %281 = arith.mulf %277, %280 : vector<2x32xf32>
    %282 = arith.addf %279, %281 : vector<2x32xf32>
    %283 = math.tanh %282 : vector<2x32xf32>
    %cst_49 = arith.constant 1.000000e+00 : f32
    %284 = vector.broadcast %cst_49 : f32 to vector<2x32xf32>
    %285 = arith.subf %284, %278 : vector<2x32xf32>
    %286 = arith.mulf %285, %283 : vector<2x32xf32>
    %287 = arith.mulf %278, %264 : vector<2x32xf32>
    %288 = arith.addf %286, %287 : vector<2x32xf32>
    %289 = arith.truncf %288 : vector<2x32xf32> to vector<2x32xbf16>
    %cst_50 = arith.constant dense<0.000000e+00> : vector<2x96xf32>
    %290 = tpu.matmul %289, %215, %cst_50 {dimension_numbers = #tpu.dot_dimension_numbers<[1], [0], [0], [1], [0, 0, 1, 1], [], []>} : vector<2x32xbf16>, vector<32x96xbf16>, vector<2x96xf32> -> vector<2x96xf32>
    %291 = vector.broadcast %214 : vector<1x96xf32> to vector<2x96xf32>
    %292 = arith.addf %290, %291 : vector<2x96xf32>
    %293 = vector.extract_strided_slice %228 {offsets = [0, 0], sizes = [2, 64], strides = [1, 1]} : vector<2x96xf32> to vector<2x64xf32>
    %294 = vector.extract_strided_slice %292 {offsets = [0, 0], sizes = [2, 64], strides = [1, 1]} : vector<2x96xf32> to vector<2x64xf32>
    %295 = arith.addf %293, %294 : vector<2x64xf32>
    %296 = arith.negf %295 : vector<2x64xf32>
    %297 = math.exp %296 : vector<2x64xf32>
    %cst_51 = arith.constant 1.000000e+00 : f32
    %298 = vector.broadcast %cst_51 : f32 to vector<2x64xf32>
    %299 = arith.addf %298, %297 : vector<2x64xf32>
    %300 = arith.divf %298, %299 : vector<2x64xf32>
    %301 = vector.extract_strided_slice %300 {offsets = [0, 0], sizes = [2, 32], strides = [1, 1]} : vector<2x64xf32> to vector<2x32xf32>
    %302 = vector.extract_strided_slice %300 {offsets = [0, 32], sizes = [2, 32], strides = [1, 1]} : vector<2x64xf32> to vector<2x32xf32>
    %303 = vector.extract_strided_slice %228 {offsets = [0, 64], sizes = [2, 32], strides = [1, 1]} : vector<2x96xf32> to vector<2x32xf32>
    %304 = vector.extract_strided_slice %292 {offsets = [0, 64], sizes = [2, 32], strides = [1, 1]} : vector<2x96xf32> to vector<2x32xf32>
    %305 = arith.mulf %301, %304 : vector<2x32xf32>
    %306 = arith.addf %303, %305 : vector<2x32xf32>
    %307 = math.tanh %306 : vector<2x32xf32>
    %cst_52 = arith.constant 1.000000e+00 : f32
    %308 = vector.broadcast %cst_52 : f32 to vector<2x32xf32>
    %309 = arith.subf %308, %302 : vector<2x32xf32>
    %310 = arith.mulf %309, %307 : vector<2x32xf32>
    %311 = arith.mulf %302, %288 : vector<2x32xf32>
    %312 = arith.addf %310, %311 : vector<2x32xf32>
    %313 = arith.truncf %312 : vector<2x32xf32> to vector<2x32xbf16>
    %cst_53 = arith.constant dense<0.000000e+00> : vector<2x96xf32>
    %314 = tpu.matmul %313, %215, %cst_53 {dimension_numbers = #tpu.dot_dimension_numbers<[1], [0], [0], [1], [0, 0, 1, 1], [], []>} : vector<2x32xbf16>, vector<32x96xbf16>, vector<2x96xf32> -> vector<2x96xf32>
    %315 = vector.broadcast %214 : vector<1x96xf32> to vector<2x96xf32>
    %316 = arith.addf %314, %315 : vector<2x96xf32>
    %317 = vector.extract_strided_slice %232 {offsets = [0, 0], sizes = [2, 64], strides = [1, 1]} : vector<2x96xf32> to vector<2x64xf32>
    %318 = vector.extract_strided_slice %316 {offsets = [0, 0], sizes = [2, 64], strides = [1, 1]} : vector<2x96xf32> to vector<2x64xf32>
    %319 = arith.addf %317, %318 : vector<2x64xf32>
    %320 = arith.negf %319 : vector<2x64xf32>
    %321 = math.exp %320 : vector<2x64xf32>
    %cst_54 = arith.constant 1.000000e+00 : f32
    %322 = vector.broadcast %cst_54 : f32 to vector<2x64xf32>
    %323 = arith.addf %322, %321 : vector<2x64xf32>
    %324 = arith.divf %322, %323 : vector<2x64xf32>
    %325 = vector.extract_strided_slice %324 {offsets = [0, 0], sizes = [2, 32], strides = [1, 1]} : vector<2x64xf32> to vector<2x32xf32>
    %326 = vector.extract_strided_slice %324 {offsets = [0, 32], sizes = [2, 32], strides = [1, 1]} : vector<2x64xf32> to vector<2x32xf32>
    %327 = vector.extract_strided_slice %232 {offsets = [0, 64], sizes = [2, 32], strides = [1, 1]} : vector<2x96xf32> to vector<2x32xf32>
    %328 = vector.extract_strided_slice %316 {offsets = [0, 64], sizes = [2, 32], strides = [1, 1]} : vector<2x96xf32> to vector<2x32xf32>
    %329 = arith.mulf %325, %328 : vector<2x32xf32>
    %330 = arith.addf %327, %329 : vector<2x32xf32>
    %331 = math.tanh %330 : vector<2x32xf32>
    %cst_55 = arith.constant 1.000000e+00 : f32
    %332 = vector.broadcast %cst_55 : f32 to vector<2x32xf32>
    %333 = arith.subf %332, %326 : vector<2x32xf32>
    %334 = arith.mulf %333, %331 : vector<2x32xf32>
    %335 = arith.mulf %326, %312 : vector<2x32xf32>
    %336 = arith.addf %334, %335 : vector<2x32xf32>
    %337 = arith.truncf %336 : vector<2x32xf32> to vector<2x32xbf16>
    %cst_56 = arith.constant dense<0.000000e+00> : vector<2x96xf32>
    %338 = tpu.matmul %337, %215, %cst_56 {dimension_numbers = #tpu.dot_dimension_numbers<[1], [0], [0], [1], [0, 0, 1, 1], [], []>} : vector<2x32xbf16>, vector<32x96xbf16>, vector<2x96xf32> -> vector<2x96xf32>
    %339 = vector.broadcast %214 : vector<1x96xf32> to vector<2x96xf32>
    %340 = arith.addf %338, %339 : vector<2x96xf32>
    %341 = vector.extract_strided_slice %236 {offsets = [0, 0], sizes = [2, 64], strides = [1, 1]} : vector<2x96xf32> to vector<2x64xf32>
    %342 = vector.extract_strided_slice %340 {offsets = [0, 0], sizes = [2, 64], strides = [1, 1]} : vector<2x96xf32> to vector<2x64xf32>
    %343 = arith.addf %341, %342 : vector<2x64xf32>
    %344 = arith.negf %343 : vector<2x64xf32>
    %345 = math.exp %344 : vector<2x64xf32>
    %cst_57 = arith.constant 1.000000e+00 : f32
    %346 = vector.broadcast %cst_57 : f32 to vector<2x64xf32>
    %347 = arith.addf %346, %345 : vector<2x64xf32>
    %348 = arith.divf %346, %347 : vector<2x64xf32>
    %349 = vector.extract_strided_slice %348 {offsets = [0, 0], sizes = [2, 32], strides = [1, 1]} : vector<2x64xf32> to vector<2x32xf32>
    %350 = vector.extract_strided_slice %348 {offsets = [0, 32], sizes = [2, 32], strides = [1, 1]} : vector<2x64xf32> to vector<2x32xf32>
    %351 = vector.extract_strided_slice %236 {offsets = [0, 64], sizes = [2, 32], strides = [1, 1]} : vector<2x96xf32> to vector<2x32xf32>
    %352 = vector.extract_strided_slice %340 {offsets = [0, 64], sizes = [2, 32], strides = [1, 1]} : vector<2x96xf32> to vector<2x32xf32>
    %353 = arith.mulf %349, %352 : vector<2x32xf32>
    %354 = arith.addf %351, %353 : vector<2x32xf32>
    %355 = math.tanh %354 : vector<2x32xf32>
    %cst_58 = arith.constant 1.000000e+00 : f32
    %356 = vector.broadcast %cst_58 : f32 to vector<2x32xf32>
    %357 = arith.subf %356, %350 : vector<2x32xf32>
    %358 = arith.mulf %357, %355 : vector<2x32xf32>
    %359 = arith.mulf %350, %336 : vector<2x32xf32>
    %360 = arith.addf %358, %359 : vector<2x32xf32>
    %361 = arith.truncf %360 : vector<2x32xf32> to vector<2x32xbf16>
    %cst_59 = arith.constant dense<0.000000e+00> : vector<2x96xf32>
    %362 = tpu.matmul %361, %215, %cst_59 {dimension_numbers = #tpu.dot_dimension_numbers<[1], [0], [0], [1], [0, 0, 1, 1], [], []>} : vector<2x32xbf16>, vector<32x96xbf16>, vector<2x96xf32> -> vector<2x96xf32>
    %363 = vector.broadcast %214 : vector<1x96xf32> to vector<2x96xf32>
    %364 = arith.addf %362, %363 : vector<2x96xf32>
    %365 = vector.extract_strided_slice %240 {offsets = [0, 0], sizes = [2, 64], strides = [1, 1]} : vector<2x96xf32> to vector<2x64xf32>
    %366 = vector.extract_strided_slice %364 {offsets = [0, 0], sizes = [2, 64], strides = [1, 1]} : vector<2x96xf32> to vector<2x64xf32>
    %367 = arith.addf %365, %366 : vector<2x64xf32>
    %368 = arith.negf %367 : vector<2x64xf32>
    %369 = math.exp %368 : vector<2x64xf32>
    %cst_60 = arith.constant 1.000000e+00 : f32
    %370 = vector.broadcast %cst_60 : f32 to vector<2x64xf32>
    %371 = arith.addf %370, %369 : vector<2x64xf32>
    %372 = arith.divf %370, %371 : vector<2x64xf32>
    %373 = vector.extract_strided_slice %372 {offsets = [0, 0], sizes = [2, 32], strides = [1, 1]} : vector<2x64xf32> to vector<2x32xf32>
    %374 = vector.extract_strided_slice %372 {offsets = [0, 32], sizes = [2, 32], strides = [1, 1]} : vector<2x64xf32> to vector<2x32xf32>
    %375 = vector.extract_strided_slice %240 {offsets = [0, 64], sizes = [2, 32], strides = [1, 1]} : vector<2x96xf32> to vector<2x32xf32>
    %376 = vector.extract_strided_slice %364 {offsets = [0, 64], sizes = [2, 32], strides = [1, 1]} : vector<2x96xf32> to vector<2x32xf32>
    %377 = arith.mulf %373, %376 : vector<2x32xf32>
    %378 = arith.addf %375, %377 : vector<2x32xf32>
    %379 = math.tanh %378 : vector<2x32xf32>
    %cst_61 = arith.constant 1.000000e+00 : f32
    %380 = vector.broadcast %cst_61 : f32 to vector<2x32xf32>
    %381 = arith.subf %380, %374 : vector<2x32xf32>
    %382 = arith.mulf %381, %379 : vector<2x32xf32>
    %383 = arith.mulf %374, %360 : vector<2x32xf32>
    %384 = arith.addf %382, %383 : vector<2x32xf32>
    %385 = arith.truncf %384 : vector<2x32xf32> to vector<2x32xbf16>
    %cst_62 = arith.constant dense<0.000000e+00> : vector<2x96xf32>
    %386 = tpu.matmul %385, %215, %cst_62 {dimension_numbers = #tpu.dot_dimension_numbers<[1], [0], [0], [1], [0, 0, 1, 1], [], []>} : vector<2x32xbf16>, vector<32x96xbf16>, vector<2x96xf32> -> vector<2x96xf32>
    %387 = vector.broadcast %214 : vector<1x96xf32> to vector<2x96xf32>
    %388 = arith.addf %386, %387 : vector<2x96xf32>
    %389 = vector.extract_strided_slice %244 {offsets = [0, 0], sizes = [2, 64], strides = [1, 1]} : vector<2x96xf32> to vector<2x64xf32>
    %390 = vector.extract_strided_slice %388 {offsets = [0, 0], sizes = [2, 64], strides = [1, 1]} : vector<2x96xf32> to vector<2x64xf32>
    %391 = arith.addf %389, %390 : vector<2x64xf32>
    %392 = arith.negf %391 : vector<2x64xf32>
    %393 = math.exp %392 : vector<2x64xf32>
    %cst_63 = arith.constant 1.000000e+00 : f32
    %394 = vector.broadcast %cst_63 : f32 to vector<2x64xf32>
    %395 = arith.addf %394, %393 : vector<2x64xf32>
    %396 = arith.divf %394, %395 : vector<2x64xf32>
    %397 = vector.extract_strided_slice %396 {offsets = [0, 0], sizes = [2, 32], strides = [1, 1]} : vector<2x64xf32> to vector<2x32xf32>
    %398 = vector.extract_strided_slice %396 {offsets = [0, 32], sizes = [2, 32], strides = [1, 1]} : vector<2x64xf32> to vector<2x32xf32>
    %399 = vector.extract_strided_slice %244 {offsets = [0, 64], sizes = [2, 32], strides = [1, 1]} : vector<2x96xf32> to vector<2x32xf32>
    %400 = vector.extract_strided_slice %388 {offsets = [0, 64], sizes = [2, 32], strides = [1, 1]} : vector<2x96xf32> to vector<2x32xf32>
    %401 = arith.mulf %397, %400 : vector<2x32xf32>
    %402 = arith.addf %399, %401 : vector<2x32xf32>
    %403 = math.tanh %402 : vector<2x32xf32>
    %cst_64 = arith.constant 1.000000e+00 : f32
    %404 = vector.broadcast %cst_64 : f32 to vector<2x32xf32>
    %405 = arith.subf %404, %398 : vector<2x32xf32>
    %406 = arith.mulf %405, %403 : vector<2x32xf32>
    %407 = arith.mulf %398, %384 : vector<2x32xf32>
    %408 = arith.addf %406, %407 : vector<2x32xf32>
    %c0_65 = arith.constant 0 : index
    %c0_66 = arith.constant 0 : index
    %409 = vector.load %arg20[%c0_65, %c0_66] : memref<2x224xf32, #tpu.memory_space<vmem>>, vector<2x32xf32>
    tpu.vector_store %arg20[%c0_65, %c0_66], %264 {strides = array<i32>} : memref<2x224xf32, #tpu.memory_space<vmem>>, vector<2x32xf32>,
    %c0_67 = arith.constant 0 : index
    %c32 = arith.constant 32 : index
    %410 = vector.load %arg20[%c0_67, %c32] : memref<2x224xf32, #tpu.memory_space<vmem>>, vector<2x32xf32>
    tpu.vector_store %arg20[%c0_67, %c32], %288 {strides = array<i32>} : memref<2x224xf32, #tpu.memory_space<vmem>>, vector<2x32xf32>,
    %c0_68 = arith.constant 0 : index
    %c64 = arith.constant 64 : index
    %411 = vector.load %arg20[%c0_68, %c64] : memref<2x224xf32, #tpu.memory_space<vmem>>, vector<2x32xf32>
    tpu.vector_store %arg20[%c0_68, %c64], %312 {strides = array<i32>} : memref<2x224xf32, #tpu.memory_space<vmem>>, vector<2x32xf32>,
    %c0_69 = arith.constant 0 : index
    %c96 = arith.constant 96 : index
    %412 = vector.load %arg20[%c0_69, %c96] : memref<2x224xf32, #tpu.memory_space<vmem>>, vector<2x32xf32>
    tpu.vector_store %arg20[%c0_69, %c96], %336 {strides = array<i32>} : memref<2x224xf32, #tpu.memory_space<vmem>>, vector<2x32xf32>,
    %c0_70 = arith.constant 0 : index
    %c128 = arith.constant 128 : index
    %413 = vector.load %arg20[%c0_70, %c128] : memref<2x224xf32, #tpu.memory_space<vmem>>, vector<2x32xf32>
    tpu.vector_store %arg20[%c0_70, %c128], %360 {strides = array<i32>} : memref<2x224xf32, #tpu.memory_space<vmem>>, vector<2x32xf32>,
    %c0_71 = arith.constant 0 : index
    %c160 = arith.constant 160 : index
    %414 = vector.load %arg20[%c0_71, %c160] : memref<2x224xf32, #tpu.memory_space<vmem>>, vector<2x32xf32>
    tpu.vector_store %arg20[%c0_71, %c160], %384 {strides = array<i32>} : memref<2x224xf32, #tpu.memory_space<vmem>>, vector<2x32xf32>,
    %c0_72 = arith.constant 0 : index
    %c192 = arith.constant 192 : index
    %415 = vector.load %arg20[%c0_72, %c192] : memref<2x224xf32, #tpu.memory_space<vmem>>, vector<2x32xf32>
    tpu.vector_store %arg20[%c0_72, %c192], %408 {strides = array<i32>} : memref<2x224xf32, #tpu.memory_space<vmem>>, vector<2x32xf32>,
    %c0_73 = arith.constant 0 : index
    %c0_74 = arith.constant 0 : index
    %416 = vector.load %arg20[%c0_73, %c0_74] : memref<2x224xf32, #tpu.memory_space<vmem>>, vector<2x224xf32>
    %c0_75 = arith.constant 0 : index
    %c0_76 = arith.constant 0 : index
    %417 = vector.load %arg9[%c0_75, %c0_76] : memref<224x32xf32, #tpu.memory_space<vmem>>, vector<224x32xf32>
    %cst_77 = arith.constant dense<0.000000e+00> : vector<2x32xf32>
    %418 = tpu.matmul %416, %417, %cst_77 {dimension_numbers = #tpu.dot_dimension_numbers<[1], [0], [0], [1], [0, 0, 1, 1], [], []>} : vector<2x224xf32>, vector<224x32xf32>, vector<2x32xf32> -> vector<2x32xf32>
    %c0_78 = arith.constant 0 : index
    %c0_79 = arith.constant 0 : index
    %419 = vector.load %arg10[%c0_78, %c0_79] : memref<1x32xf32, #tpu.memory_space<vmem>>, vector<1x32xf32>
    %420 = vector.broadcast %419 : vector<1x32xf32> to vector<2x32xf32>
    %421 = arith.addf %418, %420 : vector<2x32xf32>
    %cst_80 = arith.constant 0.000000e+00 : f32
    %422 = vector.broadcast %cst_80 : f32 to vector<2x32xf32>
    %423 = arith.maximumf %421, %422 : vector<2x32xf32>
    %c0_81 = arith.constant 0 : index
    %c0_82 = arith.constant 0 : index
    %424 = vector.load %arg11[%c0_81, %c0_82] : memref<32x32xf32, #tpu.memory_space<vmem>>, vector<32x32xf32>
    %cst_83 = arith.constant dense<0.000000e+00> : vector<2x32xf32>
    %425 = tpu.matmul %423, %424, %cst_83 {dimension_numbers = #tpu.dot_dimension_numbers<[1], [0], [0], [1], [0, 0, 1, 1], [], []>} : vector<2x32xf32>, vector<32x32xf32>, vector<2x32xf32> -> vector<2x32xf32>
    %c0_84 = arith.constant 0 : index
    %c0_85 = arith.constant 0 : index
    %426 = vector.load %arg12[%c0_84, %c0_85] : memref<1x32xf32, #tpu.memory_space<vmem>>, vector<1x32xf32>
    %427 = vector.broadcast %426 : vector<1x32xf32> to vector<2x32xf32>
    %428 = arith.addf %425, %427 : vector<2x32xf32>
    %429 = arith.mulf %428, %428 : vector<2x32xf32>
    %cst_86 = arith.constant dense<0.000000e+00> : vector<2xf32>
    %430 = vector.multi_reduction <add>, %429, %cst_86 [1] : vector<2x32xf32> to vector<2xf32>
    %431 = vector.shape_cast %430 : vector<2xf32> to vector<2x1xf32>
    %cst_87 = arith.constant 1.000000e-10 : f32
    %432 = vector.broadcast %cst_87 : f32 to vector<2x1xf32>
    %433 = arith.addf %431, %432 : vector<2x1xf32>
    %434 = math.rsqrt %433 : vector<2x1xf32>
    %435 = vector.broadcast %434 : vector<2x1xf32> to vector<2x32xf32>
    %436 = arith.mulf %428, %435 : vector<2x32xf32>
    %c0_88 = arith.constant 0 : index
    %c0_89 = arith.constant 0 : index
    %437 = vector.load %arg19[%c0_88, %c0_89] : memref<2x32xf32, #tpu.memory_space<vmem>>, vector<2x32xf32>
    tpu.vector_store %arg19[%c0_88, %c0_89], %436 {strides = array<i32>} : memref<2x32xf32, #tpu.memory_space<vmem>>, vector<2x32xf32>,
    %c0_90 = arith.constant 0 : index
    %c0_91 = arith.constant 0 : index
    %438 = vector.load %arg13[%c0_90, %c0_91] : memref<32x32xf32, #tpu.memory_space<vmem>>, vector<32x32xf32>
    %cst_92 = arith.constant dense<0.000000e+00> : vector<2x32xf32>
    %439 = tpu.matmul %436, %438, %cst_92 {dimension_numbers = #tpu.dot_dimension_numbers<[1], [0], [0], [1], [0, 0, 1, 1], [], []>} : vector<2x32xf32>, vector<32x32xf32>, vector<2x32xf32> -> vector<2x32xf32>
    %c0_93 = arith.constant 0 : index
    %c0_94 = arith.constant 0 : index
    %440 = vector.load %arg14[%c0_93, %c0_94] : memref<1x32xf32, #tpu.memory_space<vmem>>, vector<1x32xf32>
    %441 = vector.broadcast %440 : vector<1x32xf32> to vector<2x32xf32>
    %442 = arith.addf %439, %441 : vector<2x32xf32>
    %cst_95 = arith.constant 0.000000e+00 : f32
    %443 = vector.broadcast %cst_95 : f32 to vector<2x32xf32>
    %444 = arith.maximumf %442, %443 : vector<2x32xf32>
    %c0_96 = arith.constant 0 : index
    %c0_97 = arith.constant 0 : index
    %445 = vector.load %arg15[%c0_96, %c0_97] : memref<32x1xf32, #tpu.memory_space<vmem>>, vector<32x1xf32>
    %cst_98 = arith.constant dense<0.000000e+00> : vector<2x1xf32>
    %446 = tpu.matmul %444, %445, %cst_98 {dimension_numbers = #tpu.dot_dimension_numbers<[1], [0], [0], [1], [0, 0, 1, 1], [], []>} : vector<2x32xf32>, vector<32x1xf32>, vector<2x1xf32> -> vector<2x1xf32>
    %c0_99 = arith.constant 0 : index
    %c0_100 = arith.constant 0 : index
    %447 = vector.load %arg16[%c0_99, %c0_100] : memref<1x1xf32, #tpu.memory_space<vmem>>, vector<1x1xf32>
    %448 = vector.broadcast %447 : vector<1x1xf32> to vector<2x1xf32>
    %449 = arith.addf %446, %448 : vector<2x1xf32>
    %c0_101 = arith.constant 0 : index
    %c0_102 = arith.constant 0 : index
    %450 = vector.load %arg17[%c0_101, %c0_102] : memref<2x1xf32, #tpu.memory_space<vmem>>, vector<2x1xf32>
    tpu.vector_store %arg17[%c0_101, %c0_102], %449 {strides = array<i32>} : memref<2x1xf32, #tpu.memory_space<vmem>>, vector<2x1xf32>,
    return
  }
}

</mosaic_0001>

<llo_original>
// kernel: fwd.1
$region0: #{fwd.1}
  #allocation0 [shape = 'u32[]', space=smem, size = 0x4, offset = 0x4, fixed_abs, tag = 'smem constant byte address 0x4 - core index']
  #allocation1 [shape = 'u32[144,128]{1,0:T(1,128)}', space=vmem, size = 0x12000, scoped, tag = 'internal scratch']
  #allocation2 [shape = 'f32[2,224]{1,0:T(2,128)}', space=vmem, size = 0x800, scoped, tag = 'scratch operand']
  #allocation3 [shape = 'f32[1,1]{1,0:T(1,128)S(1)}', space=vmem, size = 0x200, scoped, tag = 'scoped memory for fwd.1']
  %s0 = inlined_call_operand.hbm [shape: f32[2,8], index: 0, kind: input, shape index: {}]
  %s1 = inlined_call_operand.hbm [shape: f32[1,96], index: 1, kind: input, shape index: {}]
  %s2 = inlined_call_operand.hbm [shape: bf16[32,96], index: 2, kind: input, shape index: {}]
  %s3 = inlined_call_operand.hbm [shape: f32[1,96], index: 3, kind: input, shape index: {}]
  %s4 = inlined_call_operand.hbm [shape: f32[1,96], index: 4, kind: input, shape index: {}]
  %s5 = inlined_call_operand.vmem [shape: bf16[32,96], index: 5, kind: input, shape index: {}]
  %s6 = inlined_call_operand.vmem [shape: bf16[32,96], index: 6, kind: input, shape index: {}]
  %s7 = inlined_call_operand.hbm [shape: f32[1,96], index: 7, kind: input, shape index: {}]
  %s8 = inlined_call_operand.hbm [shape: f32[1,96], index: 8, kind: input, shape index: {}]
  %s9 = inlined_call_operand.hbm [shape: f32[224,32], index: 9, kind: input, shape index: {}]
  %s10 = inlined_call_operand.hbm [shape: f32[1,32], index: 10, kind: input, shape index: {}]
  %s11 = inlined_call_operand.hbm [shape: f32[32,32], index: 11, kind: input, shape index: {}]
  %s12 = inlined_call_operand.hbm [shape: f32[1,32], index: 12, kind: input, shape index: {}]
  %s13 = inlined_call_operand.hbm [shape: f32[32,32], index: 13, kind: input, shape index: {}]
  %s14 = inlined_call_operand.hbm [shape: f32[1,32], index: 14, kind: input, shape index: {}]
  %s15 = inlined_call_operand.vmem [shape: f32[32,1], index: 15, kind: input, shape index: {}]
  %s16 = inlined_call_operand.<no memory space> [shape: f32[1,1], index: 16, kind: input, shape index: {}]
  %s17 = inlined_call_operand.vmem [shape: f32[2,1], index: 17, kind: output, shape index: {0}]
  %s18 = inlined_call_operand.vmem [shape: f32[2,1], index: 18, kind: output, shape index: {1}]
  %s19 = inlined_call_operand.hbm [shape: f32[2,32], index: 19, kind: output, shape index: {2}]
  %20 = xla_tuple %s17, %s18, %s19
  %s21 = sld [smem:[#allocation0]]
  $region146: #{fwd.1} parent=0
    _
  %s23 = ssub.s32 1, %s21
  %s24 = scalar_select 0, %s23, %s21
  %v25 = vstv %s16
  %26 = vst [vmem:[#allocation3] sm:$0x1] %v25
  $region1: #{fwd.1} parent=0
    #allocation4 [shape = 'u8[1024]{0}', space=vmem, size = 0x400, scoped, tag = 'input window, operand 0, single buffered']
    #allocation5 [shape = 's32[1]{0}', space=sflag, size = 0x4, scoped, tag = 'scoped memory for fwd.1']
    #allocation6 [shape = 's32[1]{0}', space=sflag, size = 0x4, scoped, tag = 'scoped memory for fwd.1']
    #allocation7 [shape = 'u8[512]{0}', space=vmem, size = 0x400, scoped, tag = 'input window, operand 1, single buffered']
    #allocation8 [shape = 's32[1]{0}', space=sflag, size = 0x4, scoped, tag = 'scoped memory for fwd.1']
    #allocation9 [shape = 'u8[8192]{0}', space=vmem, size = 0x2000, scoped, tag = 'input window, operand 2, single buffered']
    #allocation10 [shape = 'u8[512]{0}', space=vmem, size = 0x400, scoped, tag = 'input window, operand 3, single buffered']
    #allocation11 [shape = 's32[1]{0}', space=sflag, size = 0x4, scoped, tag = 'scoped memory for fwd.1']
    #allocation12 [shape = 'u8[512]{0}', space=vmem, size = 0x400, scoped, tag = 'input window, operand 4, single buffered']
    #allocation13 [shape = 'u8[512]{0}', space=vmem, size = 0x400, scoped, tag = 'input window, operand 7, single buffered']
    #allocation14 [shape = 's32[1]{0}', space=sflag, size = 0x4, scoped, tag = 'scoped memory for fwd.1']
    #allocation15 [shape = 'u8[512]{0}', space=vmem, size = 0x400, scoped, tag = 'input window, operand 8, single buffered']
    #allocation16 [shape = 'u8[114688]{0}', space=vmem, size = 0x1c000, scoped, tag = 'input window, operand 9, single buffered']
    #allocation17 [shape = 's32[1]{0}', space=sflag, size = 0x4, scoped, tag = 'scoped memory for fwd.1']
    #allocation18 [shape = 'u8[512]{0}', space=vmem, size = 0x400, scoped, tag = 'input window, operand 10, single buffered']
    #allocation19 [shape = 'u8[16384]{0}', space=vmem, size = 0x4000, scoped, tag = 'input window, operand 11, single buffered']
    #allocation20 [shape = 's32[1]{0}', space=sflag, size = 0x4, scoped, tag = 'scoped memory for fwd.1']
    #allocation21 [shape = 'u8[512]{0}', space=vmem, size = 0x400, scoped, tag = 'input window, operand 12, single buffered']
    #allocation22 [shape = 'u8[16384]{0}', space=vmem, size = 0x4000, scoped, tag = 'input window, operand 13, single buffered']
    #allocation23 [shape = 's32[1]{0}', space=sflag, size = 0x4, scoped, tag = 'scoped memory for fwd.1']
    #allocation24 [shape = 'u8[512]{0}', space=vmem, size = 0x400, scoped, tag = 'input window, operand 14, single buffered']
    #allocation25 [shape = 'u8[1024]{0}', space=vmem, size = 0x400, scoped, tag = 'output window, operand 2, single buffered']
    %27 = vsyncpa [#allocation5], 0
    %28 = vsyncpa [#allocation8], 0
    %29 = vsyncpa [#allocation11], 0
    %30 = vsyncpa [#allocation14], 0
    %31 = vsyncpa [#allocation17], 0
    %32 = vsyncpa [#allocation20], 0
    %33 = vsyncpa [#allocation23], 0
    %34 = vsyncpa [#allocation6], 0
    // Predicated region
    $region2: #{fwd.1} parent=1 // pred_check
      _
    $region3: #{fwd.1} parent=1 // pred_check_branch
      %36 = sbr.rel (0) target = $region5
    $region4: #{fwd.1} parent=1 // pred_region
      %s38 = ssub.s32 32, 32
      %39 = vsyncadd [#allocation5], %s38
      %s41 = sshll.u32 [#allocation4], 4
      %s42 = int_to_ptr.vmem [resolvable:$true] %s41
      %44 = dma.hbm_to_vmem [thread:$0]  %s0, 32, %s42, [#allocation5]
    $region5: #{fwd.1} parent=1 // pred_fallthru
      _
    // Predicated region
    $region6: #{fwd.1} parent=1 // pred_check
      _
    $region7: #{fwd.1} parent=1 // pred_check_branch
      %46 = sbr.rel (0) target = $region9
    $region8: #{fwd.1} parent=1 // pred_region
      %s48 = ssub.s32 16, 16
      %49 = vsyncadd [#allocation8], %s48
      %s51 = sshll.u32 [#allocation7], 4
      %s52 = int_to_ptr.vmem [resolvable:$true] %s51
      %54 = dma.hbm_to_vmem [thread:$0]  %s1, 16, %s52, [#allocation8]
    $region9: #{fwd.1} parent=1 // pred_fallthru
      _
    // Predicated region
    $region10: #{fwd.1} parent=1 // pred_check
      _
    $region11: #{fwd.1} parent=1 // pred_check_branch
      %56 = sbr.rel (0) target = $region13
    $region12: #{fwd.1} parent=1 // pred_region
      %s58 = ssub.s32 256, 256
      %59 = vsyncadd [#allocation8], %s58
      %s60 = sshll.u32 [#allocation9], 4
      %s61 = int_to_ptr.vmem [resolvable:$true] %s60
      %66 = dma.hbm_to_vmem [thread:$0]  %s2, 256, %s61, [#allocation8], 64, 64, 4
    $region13: #{fwd.1} parent=1 // pred_fallthru
      _
    // Predicated region
    $region14: #{fwd.1} parent=1 // pred_check
      _
    $region15: #{fwd.1} parent=1 // pred_check_branch
      %68 = sbr.rel (0) target = $region17
    $region16: #{fwd.1} parent=1 // pred_region
      %s70 = ssub.s32 16, 16
      %71 = vsyncadd [#allocation11], %s70
      %s73 = sshll.u32 [#allocation10], 4
      %s74 = int_to_ptr.vmem [resolvable:$true] %s73
      %76 = dma.hbm_to_vmem [thread:$0]  %s3, 16, %s74, [#allocation11]
    $region17: #{fwd.1} parent=1 // pred_fallthru
      _
    // Predicated region
    $region18: #{fwd.1} parent=1 // pred_check
      _
    $region19: #{fwd.1} parent=1 // pred_check_branch
      %78 = sbr.rel (0) target = $region21
    $region20: #{fwd.1} parent=1 // pred_region
      %s80 = ssub.s32 16, 16
      %81 = vsyncadd [#allocation11], %s80
      %s83 = sshll.u32 [#allocation12], 4
      %s84 = int_to_ptr.vmem [resolvable:$true] %s83
      %86 = dma.hbm_to_vmem [thread:$0]  %s4, 16, %s84, [#allocation11]
    $region21: #{fwd.1} parent=1 // pred_fallthru
      _
    // Predicated region
    $region22: #{fwd.1} parent=1 // pred_check
      _
    $region23: #{fwd.1} parent=1 // pred_check_branch
      %88 = sbr.rel (0) target = $region25
    $region24: #{fwd.1} parent=1 // pred_region
      _
    $region25: #{fwd.1} parent=1 // pred_fallthru
      _
    // Predicated region
    $region26: #{fwd.1} parent=1 // pred_check
      _
    $region27: #{fwd.1} parent=1 // pred_check_branch
      %90 = sbr.rel (0) target = $region29
    $region28: #{fwd.1} parent=1 // pred_region
      _
    $region29: #{fwd.1} parent=1 // pred_fallthru
      _
    // Predicated region
    $region30: #{fwd.1} parent=1 // pred_check
      _
    $region31: #{fwd.1} parent=1 // pred_check_branch
      %92 = sbr.rel (0) target = $region33
    $region32: #{fwd.1} parent=1 // pred_region
      %s94 = ssub.s32 16, 16
      %95 = vsyncadd [#allocation14], %s94
      %s97 = sshll.u32 [#allocation13], 4
      %s98 = int_to_ptr.vmem [resolvable:$true] %s97
      %100 = dma.hbm_to_vmem [thread:$0]  %s7, 16, %s98, [#allocation14]
    $region33: #{fwd.1} parent=1 // pred_fallthru
      _
    // Predicated region
    $region34: #{fwd.1} parent=1 // pred_check
      _
    $region35: #{fwd.1} parent=1 // pred_check_branch
      %102 = sbr.rel (0) target = $region37
    $region36: #{fwd.1} parent=1 // pred_region
      %s104 = ssub.s32 16, 16
      %105 = vsyncadd [#allocation14], %s104
      %s107 = sshll.u32 [#allocation15], 4
      %s108 = int_to_ptr.vmem [resolvable:$true] %s107
      %110 = dma.hbm_to_vmem [thread:$0]  %s8, 16, %s108, [#allocation14]
    $region37: #{fwd.1} parent=1 // pred_fallthru
      _
    // Predicated region
    $region38: #{fwd.1} parent=1 // pred_check
      _
    $region39: #{fwd.1} parent=1 // pred_check_branch
      %112 = sbr.rel (0) target = $region41
    $region40: #{fwd.1} parent=1 // pred_region
      %s114 = ssub.s32 3584, 3584
      %115 = vsyncadd [#allocation17], %s114
      %s116 = sshll.u32 [#allocation16], 4
      %s117 = int_to_ptr.vmem [resolvable:$true] %s116
      %122 = dma.hbm_to_vmem [thread:$0]  %s9, 3584, %s117, [#allocation17], 128, 128, 8
    $region41: #{fwd.1} parent=1 // pred_fallthru
      _
    // Predicated region
    $region42: #{fwd.1} parent=1 // pred_check
      _
    $region43: #{fwd.1} parent=1 // pred_check_branch
      %124 = sbr.rel (0) target = $region45
    $region44: #{fwd.1} parent=1 // pred_region
      %s126 = ssub.s32 16, 16
      %127 = vsyncadd [#allocation17], %s126
      %s129 = sshll.u32 [#allocation18], 4
      %s130 = int_to_ptr.vmem [resolvable:$true] %s129
      %132 = dma.hbm_to_vmem [thread:$0]  %s10, 16, %s130, [#allocation17]
    $region45: #{fwd.1} parent=1 // pred_fallthru
      _
    // Predicated region
    $region46: #{fwd.1} parent=1 // pred_check
      _
    $region47: #{fwd.1} parent=1 // pred_check_branch
      %134 = sbr.rel (0) target = $region49
    $region48: #{fwd.1} parent=1 // pred_region
      %s136 = ssub.s32 512, 512
      %137 = vsyncadd [#allocation20], %s136
      %s138 = sshll.u32 [#allocation19], 4
      %s139 = int_to_ptr.vmem [resolvable:$true] %s138
      %144 = dma.hbm_to_vmem [thread:$0]  %s11, 512, %s139, [#allocation20], 128, 128, 8
    $region49: #{fwd.1} parent=1 // pred_fallthru
      _
    // Predicated region
    $region50: #{fwd.1} parent=1 // pred_check
      _
    $region51: #{fwd.1} parent=1 // pred_check_branch
      %146 = sbr.rel (0) target = $region53
    $region52: #{fwd.1} parent=1 // pred_region
      %s148 = ssub.s32 16, 16
      %149 = vsyncadd [#allocation20], %s148
      %s151 = sshll.u32 [#allocation21], 4
      %s152 = int_to_ptr.vmem [resolvable:$true] %s151
      %154 = dma.hbm_to_vmem [thread:$0]  %s12, 16, %s152, [#allocation20]
    $region53: #{fwd.1} parent=1 // pred_fallthru
      _
    // Predicated region
    $region54: #{fwd.1} parent=1 // pred_check
      _
    $region55: #{fwd.1} parent=1 // pred_check_branch
      %156 = sbr.rel (0) target = $region57
    $region56: #{fwd.1} parent=1 // pred_region
      %s158 = ssub.s32 512, 512
      %159 = vsyncadd [#allocation23], %s158
      %s160 = sshll.u32 [#allocation22], 4
      %s161 = int_to_ptr.vmem [resolvable:$true] %s160
      %166 = dma.hbm_to_vmem [thread:$0]  %s13, 512, %s161, [#allocation23], 128, 128, 8
    $region57: #{fwd.1} parent=1 // pred_fallthru
      _
    // Predicated region
    $region58: #{fwd.1} parent=1 // pred_check
      _
    $region59: #{fwd.1} parent=1 // pred_check_branch
      %168 = sbr.rel (0) target = $region61
    $region60: #{fwd.1} parent=1 // pred_region
      %s170 = ssub.s32 16, 16
      %171 = vsyncadd [#allocation23], %s170
      %s173 = sshll.u32 [#allocation24], 4
      %s174 = int_to_ptr.vmem [resolvable:$true] %s173
      %176 = dma.hbm_to_vmem [thread:$0]  %s14, 16, %s174, [#allocation23]
    $region61: #{fwd.1} parent=1 // pred_fallthru
      _
    // Predicated region
    $region62: #{fwd.1} parent=1 // pred_check
      _
    $region63: #{fwd.1} parent=1 // pred_check_branch
      %178 = sbr.rel (0) target = $region65
    $region64: #{fwd.1} parent=1 // pred_region
      _
    $region65: #{fwd.1} parent=1 // pred_fallthru
      _
    // Predicated region
    $region66: #{fwd.1} parent=1 // pred_check
      _
    $region67: #{fwd.1} parent=1 // pred_check_branch
      %180 = sbr.rel (0) target = $region69
    $region68: #{fwd.1} parent=1 // pred_region
      _
    $region69: #{fwd.1} parent=1 // pred_fallthru
      _
    // Predicated region
    $region70: #{fwd.1} parent=1 // pred_check
      _
    $region71: #{fwd.1} parent=1 // pred_check_branch
      %182 = sbr.rel (0) target = $region73
    $region72: #{fwd.1} parent=1 // pred_region
      %183 = dma.done [#allocation5], 32
    $region73: #{fwd.1} parent=1 // pred_fallthru
      _
    // Predicated region
    $region74: #{fwd.1} parent=1 // pred_check
      _
    $region75: #{fwd.1} parent=1 // pred_check_branch
      %185 = sbr.rel (0) target = $region77
    $region76: #{fwd.1} parent=1 // pred_region
      %186 = dma.done [#allocation8], 16
    $region77: #{fwd.1} parent=1 // pred_fallthru
      _
    // Predicated region
    $region78: #{fwd.1} parent=1 // pred_check
      _
    $region79: #{fwd.1} parent=1 // pred_check_branch
      %188 = sbr.rel (0) target = $region81
    $region80: #{fwd.1} parent=1 // pred_region
      %189 = dma.done [#allocation8], 256
    $region81: #{fwd.1} parent=1 // pred_fallthru
      _
    // Predicated region
    $region82: #{fwd.1} parent=1 // pred_check
      _
    $region83: #{fwd.1} parent=1 // pred_check_branch
      %191 = sbr.rel (0) target = $region85
    $region84: #{fwd.1} parent=1 // pred_region
      %192 = dma.done [#allocation11], 16
    $region85: #{fwd.1} parent=1 // pred_fallthru
      _
    // Predicated region
    $region86: #{fwd.1} parent=1 // pred_check
      _
    $region87: #{fwd.1} parent=1 // pred_check_branch
      %194 = sbr.rel (0) target = $region89
    $region88: #{fwd.1} parent=1 // pred_region
      %195 = dma.done [#allocation11], 16
    $region89: #{fwd.1} parent=1 // pred_fallthru
      _
    // Predicated region
    $region90: #{fwd.1} parent=1 // pred_check
      _
    $region91: #{fwd.1} parent=1 // pred_check_branch
      %197 = sbr.rel (0) target = $region93
    $region92: #{fwd.1} parent=1 // pred_region
      %198 = dma.done [#allocation14], 16
    $region93: #{fwd.1} parent=1 // pred_fallthru
      _
    // Predicated region
    $region94: #{fwd.1} parent=1 // pred_check
      _
    $region95: #{fwd.1} parent=1 // pred_check_branch
      %200 = sbr.rel (0) target = $region97
    $region96: #{fwd.1} parent=1 // pred_region
      %201 = dma.done [#allocation14], 16
    $region97: #{fwd.1} parent=1 // pred_fallthru
      _
    // Predicated region
    $region98: #{fwd.1} parent=1 // pred_check
      _
    $region99: #{fwd.1} parent=1 // pred_check_branch
      %203 = sbr.rel (0) target = $region101
    $region100: #{fwd.1} parent=1 // pred_region
      %204 = dma.done [#allocation17], 3584
    $region101: #{fwd.1} parent=1 // pred_fallthru
      _
    // Predicated region
    $region102: #{fwd.1} parent=1 // pred_check
      _
    $region103: #{fwd.1} parent=1 // pred_check_branch
      %206 = sbr.rel (0) target = $region105
    $region104: #{fwd.1} parent=1 // pred_region
      %207 = dma.done [#allocation17], 16
    $region105: #{fwd.1} parent=1 // pred_fallthru
      _
    // Predicated region
    $region106: #{fwd.1} parent=1 // pred_check
      _
    $region107: #{fwd.1} parent=1 // pred_check_branch
      %209 = sbr.rel (0) target = $region109
    $region108: #{fwd.1} parent=1 // pred_region
      %210 = dma.done [#allocation20], 512
    $region109: #{fwd.1} parent=1 // pred_fallthru
      _
    // Predicated region
    $region110: #{fwd.1} parent=1 // pred_check
      _
    $region111: #{fwd.1} parent=1 // pred_check_branch
      %212 = sbr.rel (0) target = $region113
    $region112: #{fwd.1} parent=1 // pred_region
      %213 = dma.done [#allocation20], 16
    $region113: #{fwd.1} parent=1 // pred_fallthru
      _
    // Predicated region
    $region114: #{fwd.1} parent=1 // pred_check
      _
    $region115: #{fwd.1} parent=1 // pred_check_branch
      %215 = sbr.rel (0) target = $region117
    $region116: #{fwd.1} parent=1 // pred_region
      %216 = dma.done [#allocation23], 512
    $region117: #{fwd.1} parent=1 // pred_fallthru
      _
    // Predicated region
    $region118: #{fwd.1} parent=1 // pred_check
      _
    $region119: #{fwd.1} parent=1 // pred_check_branch
      %218 = sbr.rel (0) target = $region121
    $region120: #{fwd.1} parent=1 // pred_region
      %219 = dma.done [#allocation23], 16
    $region121: #{fwd.1} parent=1 // pred_fallthru
      _
    %v221 = vld [vmem:[#allocation4] sm:$0x3]
    %223 = vrot.lane.b32.xlu0 %v221, 121
    %v224 = vpop.permute.xlu0 %223
    %vm226 = vcmask 1024
    %227 = vst.msk [vmem:[%s18] sm:$0x3] %vm226, %v224
    %v228 = vld [vmem:[#allocation10] sm:$0x1]
    %v229 = vld [vmem:[#allocation12] sm:$0x1]
    %v230 = vld [vmem:[#allocation9] sm:$0xf]
    %v231 = vld [vmem:[#allocation9 + $0x4] sm:$0xf]
    %v232 = vld [vmem:[#allocation9 + $0x8] sm:$0xf]
    %v233 = vld [vmem:[#allocation9 + $0xc] sm:$0xf]
    %v234 = vld [vmem:[#allocation7] sm:$0x1]
    %235 = vset.pattern.permute.xlu0 0
    %236 = vperm.xlu0 %235, %v221
    %v237 = vpop.permute.xlu0 %236
    %v240 = vlaneseq
    %v241 = vshrl.u32 %v240, 7
    %v242 = vsub.s32 0, %v241
    %v243 = vrot.slane %v234, %v242
    %v245 = vmul.f32 %v237, %v243
    %v247 = vlaneseq
    %v248 = vshrl.u32 %v247, 7
    %v249 = vsub.s32 0, %v248
    %v250 = vrot.slane %v228, %v249
    %v252 = vadd.f32 %v245, %v250
    %253 = vset.pattern.permute.xlu0 1
    %254 = vperm.xlu0 %253, %v221
    %v255 = vpop.permute.xlu0 %254
    %v257 = vmul.f32 %v255, %v243
    %v258 = vadd.f32 %v257, %v250
    %259 = vset.pattern.permute.xlu0 2
    %260 = vperm.xlu0 %259, %v221
    %v261 = vpop.permute.xlu0 %260
    %v263 = vmul.f32 %v261, %v243
    %v264 = vadd.f32 %v263, %v250
    %265 = vset.pattern.permute.xlu0 3
    %266 = vperm.xlu0 %265, %v221
    %v267 = vpop.permute.xlu0 %266
    %v269 = vmul.f32 %v267, %v243
    %v270 = vadd.f32 %v269, %v250
    %271 = vset.pattern.permute.xlu0 4
    %272 = vperm.xlu0 %271, %v221
    %v273 = vpop.permute.xlu0 %272
    %v275 = vmul.f32 %v273, %v243
    %v276 = vadd.f32 %v275, %v250
    %277 = vset.pattern.permute.xlu0 5
    %278 = vperm.xlu0 %277, %v221
    %v279 = vpop.permute.xlu0 %278
    %v281 = vmul.f32 %v279, %v243
    %v282 = vadd.f32 %v281, %v250
    %283 = vset.pattern.permute.xlu0 6
    %284 = vperm.xlu0 %283, %v221
    %v285 = vpop.permute.xlu0 %284
    %v287 = vmul.f32 %v285, %v243
    %v288 = vadd.f32 %v287, %v250
    %v290 = vlaneseq
    %v291 = vshrl.u32 %v290, 7
    %v292 = vsub.s32 0, %v291
    %v293 = vrot.slane %v229, %v292
    %v295 = vadd.f32 %v252, %v293
    %v296 = vxor.u32 %v295, 2147483648
    %v297 = vmul.f32 %v296, 1.442695
    %v298 = vpow.pop %v297
    %v299 = vadd.f32 %v298, 1.0
    %v300 = vrcp.pop %v299
    %v301 = vmul.f32 1.0, %v300
    %302 = vrot.lane.b32.xlu0 %v293, 64
    %v303 = vpop.permute.xlu0 %302
    %v305 = vmul.f32 %v301, %v303
    %307 = vrot.lane.b32.xlu0 %v305, 64
    %v308 = vpop.permute.xlu0 %307
    %v310 = vadd.f32 %v252, %v308
    %v311 = vtanh.pop %v310
    %v312 = vsub.f32 1.0, %v301
    %314 = vrot.lane.b32.xlu0 %v311, 96
    %v315 = vpop.permute.xlu0 %314
    %v317 = vmul.f32 %v312, %v315
    %v318 = vpack.c.bf16 %v317, %v317
    %320 = vrot.lane.b32.xlu0 %v318, 96
    %v321 = vpop.permute.xlu0 %320
    %v326 = vunpack.c.l.b16 %v230
    %v327 = vunpack.c.l.b16 %v231
    %v328 = vunpack.c.l.b16 %v232
    %v329 = vunpack.c.l.b16 %v233
    %v330 = vpack.c.b16 %v327, %v326
    %v331 = vpack.c.b16 %v329, %v328
    %vm334 = vcmask 261120
    %v336 = vsel %vm334, %v321, 0
    %338 = vmatprep.subr.bf16.mxu0 0
    %339 = vmatpush1.bf16.msra.mxu0 %v330
    %340 = vmatprep.subr.bf16.mxu0 0
    %341 = vmatpush1.bf16.msra.mxu0 %v331
    %342 = vmatprep.subr.bf16.mxu0 0
    %343 = vmatpush1.bf16.msra.mxu0 0
    %344 = vmatprep.subr.bf16.mxu0 0
    %345 = vmatpush1.bf16.msra.mxu0 0
    %346 = vmatprep.subr.bf16.mxu0 0
    %347 = vmatpush1.bf16.msra.mxu0 0
    %348 = vmatprep.subr.bf16.mxu0 0
    %349 = vmatpush1.bf16.msra.mxu0 0
    %350 = vmatprep.subr.bf16.mxu0 0
    %351 = vmatpush1.bf16.msra.mxu0 0
    %352 = vmatprep.subr.bf16.mxu0 0
    %353 = vmatpush1.bf16.msra.mxu0 0
    %354 = vmatprep.subr.bf16.mxu0 0
    %355 = vmatpush1.bf16.msra.mxu0 0
    %356 = vmatprep.subr.bf16.mxu0 0
    %357 = vmatpush1.bf16.msra.mxu0 0
    %358 = vmatprep.subr.bf16.mxu0 0
    %359 = vmatpush1.bf16.msra.mxu0 0
    %360 = vmatprep.subr.bf16.mxu0 0
    %361 = vmatpush1.bf16.msra.mxu0 0
    %362 = vmatprep.subr.bf16.mxu0 0
    %363 = vmatpush1.bf16.msra.mxu0 0
    %364 = vmatprep.subr.bf16.mxu0 0
    %365 = vmatpush1.bf16.msra.mxu0 0
    %366 = vmatprep.subr.bf16.mxu0 0
    %367 = vmatpush1.bf16.msra.mxu0 0
    %368 = vmatprep.subr.bf16.mxu0 0
    %369 = vmatpush1.bf16.msra.mxu0 0
    %370 = vmatprep.mubr.bf16.mxu0 0
    %371 = vmatmul.mubr.bf16.gmra.mrb[0].mxu0 %v336
    %v372 = vpop.f32.mrb[0].mxu0
    %v373 = vadd.f32 %v293, %v372
    %v374 = vpop.f32.mrb[0].mxu0
    %v375 = vpop.f32.mrb[0].mxu0
    %v376 = vpop.f32.mrb[0].mxu0
    %377 = vdwg.mxu0
    %v378 = vadd.f32 %v258, %v373
    %v379 = vxor.u32 %v378, 2147483648
    %v380 = vmul.f32 %v379, 1.442695
    %v381 = vpow.pop %v380
    %v382 = vadd.f32 %v381, 1.0
    %v383 = vrcp.pop %v382
    %v384 = vmul.f32 1.0, %v383
    %386 = vrot.lane.b32.xlu0 %v373, 64
    %v387 = vpop.permute.xlu0 %386
    %v389 = vmul.f32 %v384, %v387
    %391 = vrot.lane.b32.xlu0 %v389, 64
    %v392 = vpop.permute.xlu0 %391
    %v394 = vadd.f32 %v258, %v392
    %v395 = vtanh.pop %v394
    %v396 = vsub.f32 1.0, %v384
    %398 = vrot.lane.b32.xlu0 %v395, 96
    %v399 = vpop.permute.xlu0 %398
    %v401 = vmul.f32 %v396, %v399
    %v402 = vmul.f32 %v384, %v317
    %v403 = vadd.f32 %v401, %v402
    %v404 = vpack.c.bf16 %v403, %v403
    %406 = vrot.lane.b32.xlu0 %v404, 96
    %v407 = vpop.permute.xlu0 %406
    %v409 = vsel %vm334, %v407, 0
    %411 = vmatprep.subr.bf16.mxu0 0
    %412 = vmatpush1.bf16.msra.mxu0 %v330
    %413 = vmatprep.subr.bf16.mxu0 0
    %414 = vmatpush1.bf16.msra.mxu0 %v331
    %415 = vmatprep.subr.bf16.mxu0 0
    %416 = vmatpush1.bf16.msra.mxu0 0
    %417 = vmatprep.subr.bf16.mxu0 0
    %418 = vmatpush1.bf16.msra.mxu0 0
    %419 = vmatprep.subr.bf16.mxu0 0
    %420 = vmatpush1.bf16.msra.mxu0 0
    %421 = vmatprep.subr.bf16.mxu0 0
    %422 = vmatpush1.bf16.msra.mxu0 0
    %423 = vmatprep.subr.bf16.mxu0 0
    %424 = vmatpush1.bf16.msra.mxu0 0
    %425 = vmatprep.subr.bf16.mxu0 0
    %426 = vmatpush1.bf16.msra.mxu0 0
    %427 = vmatprep.subr.bf16.mxu0 0
    %428 = vmatpush1.bf16.msra.mxu0 0
    %429 = vmatprep.subr.bf16.mxu0 0
    %430 = vmatpush1.bf16.msra.mxu0 0
    %431 = vmatprep.subr.bf16.mxu0 0
    %432 = vmatpush1.bf16.msra.mxu0 0
    %433 = vmatprep.subr.bf16.mxu0 0
    %434 = vmatpush1.bf16.msra.mxu0 0
    %435 = vmatprep.subr.bf16.mxu0 0
    %436 = vmatpush1.bf16.msra.mxu0 0
    %437 = vmatprep.subr.bf16.mxu0 0
    %438 = vmatpush1.bf16.msra.mxu0 0
    %439 = vmatprep.subr.bf16.mxu0 0
    %440 = vmatpush1.bf16.msra.mxu0 0
    %441 = vmatprep.subr.bf16.mxu0 0
    %442 = vmatpush1.bf16.msra.mxu0 0
    %443 = vmatprep.mubr.bf16.mxu0 0
    %444 = vmatmul.mubr.bf16.gmra.mrb[0].mxu0 %v409
    %v445 = vpop.f32.mrb[0].mxu0
    %v446 = vadd.f32 %v293, %v445
    %v447 = vpop.f32.mrb[0].mxu0
    %v448 = vpop.f32.mrb[0].mxu0
    %v449 = vpop.f32.mrb[0].mxu0
    %450 = vdwg.mxu0
    %v451 = vadd.f32 %v264, %v446
    %v452 = vxor.u32 %v451, 2147483648
    %v453 = vmul.f32 %v452, 1.442695
    %v454 = vpow.pop %v453
    %v455 = vadd.f32 %v454, 1.0
    %v456 = vrcp.pop %v455
    %v457 = vmul.f32 1.0, %v456
    %459 = vrot.lane.b32.xlu0 %v446, 64
    %v460 = vpop.permute.xlu0 %459
    %v462 = vmul.f32 %v457, %v460
    %464 = vrot.lane.b32.xlu0 %v462, 64
    %v465 = vpop.permute.xlu0 %464
    %v467 = vadd.f32 %v264, %v465
    %v468 = vtanh.pop %v467
    %v469 = vsub.f32 1.0, %v457
    %471 = vrot.lane.b32.xlu0 %v468, 96
    %v472 = vpop.permute.xlu0 %471
    %v474 = vmul.f32 %v469, %v472
    %v475 = vmul.f32 %v457, %v403
    %v476 = vadd.f32 %v474, %v475
    %v477 = vpack.c.bf16 %v476, %v476
    %479 = vrot.lane.b32.xlu0 %v477, 96
    %v480 = vpop.permute.xlu0 %479
    %v482 = vsel %vm334, %v480, 0
    %484 = vmatprep.subr.bf16.mxu0 0
    %485 = vmatpush1.bf16.msra.mxu0 %v330
    %486 = vmatprep.subr.bf16.mxu0 0
    %487 = vmatpush1.bf16.msra.mxu0 %v331
    %488 = vmatprep.subr.bf16.mxu0 0
    %489 = vmatpush1.bf16.msra.mxu0 0
    %490 = vmatprep.subr.bf16.mxu0 0
    %491 = vmatpush1.bf16.msra.mxu0 0
    %492 = vmatprep.subr.bf16.mxu0 0
    %493 = vmatpush1.bf16.msra.mxu0 0
    %494 = vmatprep.subr.bf16.mxu0 0
    %495 = vmatpush1.bf16.msra.mxu0 0
    %496 = vmatprep.subr.bf16.mxu0 0
    %497 = vmatpush1.bf16.msra.mxu0 0
    %498 = vmatprep.subr.bf16.mxu0 0
    %499 = vmatpush1.bf16.msra.mxu0 0
    %500 = vmatprep.subr.bf16.mxu0 0
    %501 = vmatpush1.bf16.msra.mxu0 0
    %502 = vmatprep.subr.bf16.mxu0 0
    %503 = vmatpush1.bf16.msra.mxu0 0
    %504 = vmatprep.subr.bf16.mxu0 0
    %505 = vmatpush1.bf16.msra.mxu0 0
    %506 = vmatprep.subr.bf16.mxu0 0
    %507 = vmatpush1.bf16.msra.mxu0 0
    %508 = vmatprep.subr.bf16.mxu0 0
    %509 = vmatpush1.bf16.msra.mxu0 0
    %510 = vmatprep.subr.bf16.mxu0 0
    %511 = vmatpush1.bf16.msra.mxu0 0
    %512 = vmatprep.subr.bf16.mxu0 0
    %513 = vmatpush1.bf16.msra.mxu0 0
    %514 = vmatprep.subr.bf16.mxu0 0
    %515 = vmatpush1.bf16.msra.mxu0 0
    %516 = vmatprep.mubr.bf16.mxu0 0
    %517 = vmatmul.mubr.bf16.gmra.mrb[0].mxu0 %v482
    %v518 = vpop.f32.mrb[0].mxu0
    %v519 = vadd.f32 %v293, %v518
    %v520 = vpop.f32.mrb[0].mxu0
    %v521 = vpop.f32.mrb[0].mxu0
    %v522 = vpop.f32.mrb[0].mxu0
    %523 = vdwg.mxu0
    %v524 = vadd.f32 %v270, %v519
    %v525 = vxor.u32 %v524, 2147483648
    %v526 = vmul.f32 %v525, 1.442695
    %v527 = vpow.pop %v526
    %v528 = vadd.f32 %v527, 1.0
    %v529 = vrcp.pop %v528
    %v530 = vmul.f32 1.0, %v529
    %532 = vrot.lane.b32.xlu0 %v519, 64
    %v533 = vpop.permute.xlu0 %532
    %v535 = vmul.f32 %v530, %v533
    %537 = vrot.lane.b32.xlu0 %v535, 64
    %v538 = vpop.permute.xlu0 %537
    %v540 = vadd.f32 %v270, %v538
    %v541 = vtanh.pop %v540
    %v542 = vsub.f32 1.0, %v530
    %544 = vrot.lane.b32.xlu0 %v541, 96
    %v545 = vpop.permute.xlu0 %544
    %v547 = vmul.f32 %v542, %v545
    %v548 = vmul.f32 %v530, %v476
    %v549 = vadd.f32 %v547, %v548
    %v550 = vpack.c.bf16 %v549, %v549
    %552 = vrot.lane.b32.xlu0 %v550, 96
    %v553 = vpop.permute.xlu0 %552
    %v555 = vsel %vm334, %v553, 0
    %557 = vmatprep.subr.bf16.mxu0 0
    %558 = vmatpush1.bf16.msra.mxu0 %v330
    %559 = vmatprep.subr.bf16.mxu0 0
    %560 = vmatpush1.bf16.msra.mxu0 %v331
    %561 = vmatprep.subr.bf16.mxu0 0
    %562 = vmatpush1.bf16.msra.mxu0 0
    %563 = vmatprep.subr.bf16.mxu0 0
    %564 = vmatpush1.bf16.msra.mxu0 0
    %565 = vmatprep.subr.bf16.mxu0 0
    %566 = vmatpush1.bf16.msra.mxu0 0
    %567 = vmatprep.subr.bf16.mxu0 0
    %568 = vmatpush1.bf16.msra.mxu0 0
    %569 = vmatprep.subr.bf16.mxu0 0
    %570 = vmatpush1.bf16.msra.mxu0 0
    %571 = vmatprep.subr.bf16.mxu0 0
    %572 = vmatpush1.bf16.msra.mxu0 0
    %573 = vmatprep.subr.bf16.mxu0 0
    %574 = vmatpush1.bf16.msra.mxu0 0
    %575 = vmatprep.subr.bf16.mxu0 0
    %576 = vmatpush1.bf16.msra.mxu0 0
    %577 = vmatprep.subr.bf16.mxu0 0
    %578 = vmatpush1.bf16.msra.mxu0 0
    %579 = vmatprep.subr.bf16.mxu0 0
    %580 = vmatpush1.bf16.msra.mxu0 0
    %581 = vmatprep.subr.bf16.mxu0 0
    %582 = vmatpush1.bf16.msra.mxu0 0
    %583 = vmatprep.subr.bf16.mxu0 0
    %584 = vmatpush1.bf16.msra.mxu0 0
    %585 = vmatprep.subr.bf16.mxu0 0
    %586 = vmatpush1.bf16.msra.mxu0 0
    %587 = vmatprep.subr.bf16.mxu0 0
    %588 = vmatpush1.bf16.msra.mxu0 0
    %589 = vmatprep.mubr.bf16.mxu0 0
    %590 = vmatmul.mubr.bf16.gmra.mrb[0].mxu0 %v555
    %v591 = vpop.f32.mrb[0].mxu0
    %v592 = vadd.f32 %v293, %v591
    %v593 = vpop.f32.mrb[0].mxu0
    %v594 = vpop.f32.mrb[0].mxu0
    %v595 = vpop.f32.mrb[0].mxu0
    %596 = vdwg.mxu0
    %v597 = vadd.f32 %v276, %v592
    %v598 = vxor.u32 %v597, 2147483648
    %v599 = vmul.f32 %v598, 1.442695
    %v600 = vpow.pop %v599
    %v601 = vadd.f32 %v600, 1.0
    %v602 = vrcp.pop %v601
    %v603 = vmul.f32 1.0, %v602
    %605 = vrot.lane.b32.xlu0 %v592, 64
    %v606 = vpop.permute.xlu0 %605
    %v608 = vmul.f32 %v603, %v606
    %610 = vrot.lane.b32.xlu0 %v608, 64
    %v611 = vpop.permute.xlu0 %610
    %v613 = vadd.f32 %v276, %v611
    %v614 = vtanh.pop %v613
    %v615 = vsub.f32 1.0, %v603
    %617 = vrot.lane.b32.xlu0 %v614, 96
    %v618 = vpop.permute.xlu0 %617
    %v620 = vmul.f32 %v615, %v618
    %v621 = vmul.f32 %v603, %v549
    %v622 = vadd.f32 %v620, %v621
    %v623 = vpack.c.bf16 %v622, %v622
    %625 = vrot.lane.b32.xlu0 %v623, 96
    %v626 = vpop.permute.xlu0 %625
    %v628 = vsel %vm334, %v626, 0
    %630 = vmatprep.subr.bf16.mxu0 0
    %631 = vmatpush1.bf16.msra.mxu0 %v330
    %632 = vmatprep.subr.bf16.mxu0 0
    %633 = vmatpush1.bf16.msra.mxu0 %v331
    %634 = vmatprep.subr.bf16.mxu0 0
    %635 = vmatpush1.bf16.msra.mxu0 0
    %636 = vmatprep.subr.bf16.mxu0 0
    %637 = vmatpush1.bf16.msra.mxu0 0
    %638 = vmatprep.subr.bf16.mxu0 0
    %639 = vmatpush1.bf16.msra.mxu0 0
    %640 = vmatprep.subr.bf16.mxu0 0
    %641 = vmatpush1.bf16.msra.mxu0 0
    %642 = vmatprep.subr.bf16.mxu0 0
    %643 = vmatpush1.bf16.msra.mxu0 0
    %644 = vmatprep.subr.bf16.mxu0 0
    %645 = vmatpush1.bf16.msra.mxu0 0
    %646 = vmatprep.subr.bf16.mxu0 0
    %647 = vmatpush1.bf16.msra.mxu0 0
    %648 = vmatprep.subr.bf16.mxu0 0
    %649 = vmatpush1.bf16.msra.mxu0 0
    %650 = vmatprep.subr.bf16.mxu0 0
    %651 = vmatpush1.bf16.msra.mxu0 0
    %652 = vmatprep.subr.bf16.mxu0 0
    %653 = vmatpush1.bf16.msra.mxu0 0
    %654 = vmatprep.subr.bf16.mxu0 0
    %655 = vmatpush1.bf16.msra.mxu0 0
    %656 = vmatprep.subr.bf16.mxu0 0
    %657 = vmatpush1.bf16.msra.mxu0 0
    %658 = vmatprep.subr.bf16.mxu0 0
    %659 = vmatpush1.bf16.msra.mxu0 0
    %660 = vmatprep.subr.bf16.mxu0 0
    %661 = vmatpush1.bf16.msra.mxu0 0
    %662 = vmatprep.mubr.bf16.mxu0 0
    %663 = vmatmul.mubr.bf16.gmra.mrb[0].mxu0 %v628
    %v664 = vpop.f32.mrb[0].mxu0
    %v665 = vadd.f32 %v293, %v664
    %v666 = vpop.f32.mrb[0].mxu0
    %v667 = vpop.f32.mrb[0].mxu0
    %v668 = vpop.f32.mrb[0].mxu0
    %669 = vdwg.mxu0
    %v670 = vadd.f32 %v282, %v665
    %v671 = vxor.u32 %v670, 2147483648
    %v672 = vmul.f32 %v671, 1.442695
    %v673 = vpow.pop %v672
    %v674 = vadd.f32 %v673, 1.0
    %v675 = vrcp.pop %v674
    %v676 = vmul.f32 1.0, %v675
    %678 = vrot.lane.b32.xlu0 %v665, 64
    %v679 = vpop.permute.xlu0 %678
    %v681 = vmul.f32 %v676, %v679
    %683 = vrot.lane.b32.xlu0 %v681, 64
    %v684 = vpop.permute.xlu0 %683
    %v686 = vadd.f32 %v282, %v684
    %v687 = vtanh.pop %v686
    %v688 = vsub.f32 1.0, %v676
    %690 = vrot.lane.b32.xlu0 %v687, 96
    %v691 = vpop.permute.xlu0 %690
    %v693 = vmul.f32 %v688, %v691
    %v694 = vmul.f32 %v676, %v622
    %v695 = vadd.f32 %v693, %v694
    %v696 = vpack.c.bf16 %v695, %v695
    %698 = vrot.lane.b32.xlu0 %v696, 96
    %v699 = vpop.permute.xlu0 %698
    %v701 = vsel %vm334, %v699, 0
    %703 = vmatprep.subr.bf16.mxu0 0
    %704 = vmatpush1.bf16.msra.mxu0 %v330
    %705 = vmatprep.subr.bf16.mxu0 0
    %706 = vmatpush1.bf16.msra.mxu0 %v331
    %707 = vmatprep.subr.bf16.mxu0 0
    %708 = vmatpush1.bf16.msra.mxu0 0
    %709 = vmatprep.subr.bf16.mxu0 0
    %710 = vmatpush1.bf16.msra.mxu0 0
    %711 = vmatprep.subr.bf16.mxu0 0
    %712 = vmatpush1.bf16.msra.mxu0 0
    %713 = vmatprep.subr.bf16.mxu0 0
    %714 = vmatpush1.bf16.msra.mxu0 0
    %715 = vmatprep.subr.bf16.mxu0 0
    %716 = vmatpush1.bf16.msra.mxu0 0
    %717 = vmatprep.subr.bf16.mxu0 0
    %718 = vmatpush1.bf16.msra.mxu0 0
    %719 = vmatprep.subr.bf16.mxu0 0
    %720 = vmatpush1.bf16.msra.mxu0 0
    %721 = vmatprep.subr.bf16.mxu0 0
    %722 = vmatpush1.bf16.msra.mxu0 0
    %723 = vmatprep.subr.bf16.mxu0 0
    %724 = vmatpush1.bf16.msra.mxu0 0
    %725 = vmatprep.subr.bf16.mxu0 0
    %726 = vmatpush1.bf16.msra.mxu0 0
    %727 = vmatprep.subr.bf16.mxu0 0
    %728 = vmatpush1.bf16.msra.mxu0 0
    %729 = vmatprep.subr.bf16.mxu0 0
    %730 = vmatpush1.bf16.msra.mxu0 0
    %731 = vmatprep.subr.bf16.mxu0 0
    %732 = vmatpush1.bf16.msra.mxu0 0
    %733 = vmatprep.subr.bf16.mxu0 0
    %734 = vmatpush1.bf16.msra.mxu0 0
    %735 = vmatprep.mubr.bf16.mxu0 0
    %736 = vmatmul.mubr.bf16.gmra.mrb[0].mxu0 %v701
    %v737 = vpop.f32.mrb[0].mxu0
    %v738 = vadd.f32 %v293, %v737
    %v739 = vpop.f32.mrb[0].mxu0
    %v740 = vpop.f32.mrb[0].mxu0
    %v741 = vpop.f32.mrb[0].mxu0
    %742 = vdwg.mxu0
    %v743 = vadd.f32 %v288, %v738
    %v744 = vxor.u32 %v743, 2147483648
    %v745 = vmul.f32 %v744, 1.442695
    %v746 = vpow.pop %v745
    %v747 = vadd.f32 %v746, 1.0
    %v748 = vrcp.pop %v747
    %v749 = vmul.f32 1.0, %v748
    %751 = vrot.lane.b32.xlu0 %v738, 64
    %v752 = vpop.permute.xlu0 %751
    %v754 = vmul.f32 %v749, %v752
    %756 = vrot.lane.b32.xlu0 %v754, 64
    %v757 = vpop.permute.xlu0 %756
    %v759 = vadd.f32 %v288, %v757
    %v760 = vtanh.pop %v759
    %v761 = vsub.f32 1.0, %v749
    %763 = vrot.lane.b32.xlu0 %v760, 96
    %v764 = vpop.permute.xlu0 %763
    %v766 = vmul.f32 %v761, %v764
    %v767 = vmul.f32 %v749, %v695
    %v768 = vadd.f32 %v766, %v767
    %v769 = vld [vmem:[#allocation13] sm:$0x1]
    %v770 = vld [vmem:[#allocation15] sm:$0x1]
    %v771 = vld [vmem:[%s6] sm:$0xf]
    %v772 = vld [vmem:[%s6 + $0x4] sm:$0xf]
    %v773 = vld [vmem:[%s6 + $0x8] sm:$0xf]
    %v774 = vld [vmem:[%s6 + $0xc] sm:$0xf]
    %v775 = vld [vmem:[%s5] sm:$0xf]
    %v776 = vld [vmem:[%s5 + $0x4] sm:$0xf]
    %v777 = vld [vmem:[%s5 + $0x8] sm:$0xf]
    %v778 = vld [vmem:[%s5 + $0xc] sm:$0xf]
    %v780 = vlaneseq
    %v781 = vshrl.u32 %v780, 7
    %v782 = vsub.s32 0, %v781
    %v783 = vrot.slane %v769, %v782
    %v789 = vunpack.c.l.b16 %v775
    %v790 = vunpack.c.l.b16 %v776
    %v791 = vunpack.c.l.b16 %v777
    %v792 = vunpack.c.l.b16 %v778
    %v793 = vpack.c.b16 %v790, %v789
    %v794 = vpack.c.b16 %v792, %v791
    %797 = vmatprep.subr.bf16.mxu0 0
    %798 = vmatpush1.bf16.msra.mxu0 %v793
    %799 = vmatprep.subr.bf16.mxu0 0
    %800 = vmatpush1.bf16.msra.mxu0 %v794
    %801 = vmatprep.subr.bf16.mxu0 0
    %802 = vmatpush1.bf16.msra.mxu0 0
    %803 = vmatprep.subr.bf16.mxu0 0
    %804 = vmatpush1.bf16.msra.mxu0 0
    %805 = vmatprep.subr.bf16.mxu0 0
    %806 = vmatpush1.bf16.msra.mxu0 0
    %807 = vmatprep.subr.bf16.mxu0 0
    %808 = vmatpush1.bf16.msra.mxu0 0
    %809 = vmatprep.subr.bf16.mxu0 0
    %810 = vmatpush1.bf16.msra.mxu0 0
    %811 = vmatprep.subr.bf16.mxu0 0
    %812 = vmatpush1.bf16.msra.mxu0 0
    %813 = vmatprep.subr.bf16.mxu0 0
    %814 = vmatpush1.bf16.msra.mxu0 0
    %815 = vmatprep.subr.bf16.mxu0 0
    %816 = vmatpush1.bf16.msra.mxu0 0
    %817 = vmatprep.subr.bf16.mxu0 0
    %818 = vmatpush1.bf16.msra.mxu0 0
    %819 = vmatprep.subr.bf16.mxu0 0
    %820 = vmatpush1.bf16.msra.mxu0 0
    %821 = vmatprep.subr.bf16.mxu0 0
    %822 = vmatpush1.bf16.msra.mxu0 0
    %823 = vmatprep.subr.bf16.mxu0 0
    %824 = vmatpush1.bf16.msra.mxu0 0
    %825 = vmatprep.subr.bf16.mxu0 0
    %826 = vmatpush1.bf16.msra.mxu0 0
    %827 = vmatprep.subr.bf16.mxu0 0
    %828 = vmatpush1.bf16.msra.mxu0 0
    %829 = vmatprep.mubr.bf16.mxu0 0
    %830 = vmatmul.mubr.bf16.gmra.mrb[0].mxu0 %v336
    %v831 = vpop.f32.mrb[0].mxu0
    %v832 = vadd.f32 %v783, %v831
    %v833 = vpop.f32.mrb[0].mxu0
    %v834 = vpop.f32.mrb[0].mxu0
    %v835 = vpop.f32.mrb[0].mxu0
    %836 = vdwg.mxu0
    %837 = vmatprep.subr.bf16.mxu0 0
    %838 = vmatpush1.bf16.msra.mxu0 %v793
    %839 = vmatprep.subr.bf16.mxu0 0
    %840 = vmatpush1.bf16.msra.mxu0 %v794
    %841 = vmatprep.subr.bf16.mxu0 0
    %842 = vmatpush1.bf16.msra.mxu0 0
    %843 = vmatprep.subr.bf16.mxu0 0
    %844 = vmatpush1.bf16.msra.mxu0 0
    %845 = vmatprep.subr.bf16.mxu0 0
    %846 = vmatpush1.bf16.msra.mxu0 0
    %847 = vmatprep.subr.bf16.mxu0 0
    %848 = vmatpush1.bf16.msra.mxu0 0
    %849 = vmatprep.subr.bf16.mxu0 0
    %850 = vmatpush1.bf16.msra.mxu0 0
    %851 = vmatprep.subr.bf16.mxu0 0
    %852 = vmatpush1.bf16.msra.mxu0 0
    %853 = vmatprep.subr.bf16.mxu0 0
    %854 = vmatpush1.bf16.msra.mxu0 0
    %855 = vmatprep.subr.bf16.mxu0 0
    %856 = vmatpush1.bf16.msra.mxu0 0
    %857 = vmatprep.subr.bf16.mxu0 0
    %858 = vmatpush1.bf16.msra.mxu0 0
    %859 = vmatprep.subr.bf16.mxu0 0
    %860 = vmatpush1.bf16.msra.mxu0 0
    %861 = vmatprep.subr.bf16.mxu0 0
    %862 = vmatpush1.bf16.msra.mxu0 0
    %863 = vmatprep.subr.bf16.mxu0 0
    %864 = vmatpush1.bf16.msra.mxu0 0
    %865 = vmatprep.subr.bf16.mxu0 0
    %866 = vmatpush1.bf16.msra.mxu0 0
    %867 = vmatprep.subr.bf16.mxu0 0
    %868 = vmatpush1.bf16.msra.mxu0 0
    %869 = vmatprep.mubr.bf16.mxu0 0
    %870 = vmatmul.mubr.bf16.gmra.mrb[0].mxu0 %v409
    %v871 = vpop.f32.mrb[0].mxu0
    %v872 = vadd.f32 %v783, %v871
    %v873 = vpop.f32.mrb[0].mxu0
    %v874 = vpop.f32.mrb[0].mxu0
    %v875 = vpop.f32.mrb[0].mxu0
    %876 = vdwg.mxu0
    %877 = vmatprep.subr.bf16.mxu0 0
    %878 = vmatpush1.bf16.msra.mxu0 %v793
    %879 = vmatprep.subr.bf16.mxu0 0
    %880 = vmatpush1.bf16.msra.mxu0 %v794
    %881 = vmatprep.subr.bf16.mxu0 0
    %882 = vmatpush1.bf16.msra.mxu0 0
    %883 = vmatprep.subr.bf16.mxu0 0
    %884 = vmatpush1.bf16.msra.mxu0 0
    %885 = vmatprep.subr.bf16.mxu0 0
    %886 = vmatpush1.bf16.msra.mxu0 0
    %887 = vmatprep.subr.bf16.mxu0 0
    %888 = vmatpush1.bf16.msra.mxu0 0
    %889 = vmatprep.subr.bf16.mxu0 0
    %890 = vmatpush1.bf16.msra.mxu0 0
    %891 = vmatprep.subr.bf16.mxu0 0
    %892 = vmatpush1.bf16.msra.mxu0 0
    %893 = vmatprep.subr.bf16.mxu0 0
    %894 = vmatpush1.bf16.msra.mxu0 0
    %895 = vmatprep.subr.bf16.mxu0 0
    %896 = vmatpush1.bf16.msra.mxu0 0
    %897 = vmatprep.subr.bf16.mxu0 0
    %898 = vmatpush1.bf16.msra.mxu0 0
    %899 = vmatprep.subr.bf16.mxu0 0
    %900 = vmatpush1.bf16.msra.mxu0 0
    %901 = vmatprep.subr.bf16.mxu0 0
    %902 = vmatpush1.bf16.msra.mxu0 0
    %903 = vmatprep.subr.bf16.mxu0 0
    %904 = vmatpush1.bf16.msra.mxu0 0
    %905 = vmatprep.subr.bf16.mxu0 0
    %906 = vmatpush1.bf16.msra.mxu0 0
    %907 = vmatprep.subr.bf16.mxu0 0
    %908 = vmatpush1.bf16.msra.mxu0 0
    %909 = vmatprep.mubr.bf16.mxu0 0
    %910 = vmatmul.mubr.bf16.gmra.mrb[0].mxu0 %v482
    %v911 = vpop.f32.mrb[0].mxu0
    %v912 = vadd.f32 %v783, %v911
    %v913 = vpop.f32.mrb[0].mxu0
    %v914 = vpop.f32.mrb[0].mxu0
    %v915 = vpop.f32.mrb[0].mxu0
    %916 = vdwg.mxu0
    %917 = vmatprep.subr.bf16.mxu0 0
    %918 = vmatpush1.bf16.msra.mxu0 %v793
    %919 = vmatprep.subr.bf16.mxu0 0
    %920 = vmatpush1.bf16.msra.mxu0 %v794
    %921 = vmatprep.subr.bf16.mxu0 0
    %922 = vmatpush1.bf16.msra.mxu0 0
    %923 = vmatprep.subr.bf16.mxu0 0
    %924 = vmatpush1.bf16.msra.mxu0 0
    %925 = vmatprep.subr.bf16.mxu0 0
    %926 = vmatpush1.bf16.msra.mxu0 0
    %927 = vmatprep.subr.bf16.mxu0 0
    %928 = vmatpush1.bf16.msra.mxu0 0
    %929 = vmatprep.subr.bf16.mxu0 0
    %930 = vmatpush1.bf16.msra.mxu0 0
    %931 = vmatprep.subr.bf16.mxu0 0
    %932 = vmatpush1.bf16.msra.mxu0 0
    %933 = vmatprep.subr.bf16.mxu0 0
    %934 = vmatpush1.bf16.msra.mxu0 0
    %935 = vmatprep.subr.bf16.mxu0 0
    %936 = vmatpush1.bf16.msra.mxu0 0
    %937 = vmatprep.subr.bf16.mxu0 0
    %938 = vmatpush1.bf16.msra.mxu0 0
    %939 = vmatprep.subr.bf16.mxu0 0
    %940 = vmatpush1.bf16.msra.mxu0 0
    %941 = vmatprep.subr.bf16.mxu0 0
    %942 = vmatpush1.bf16.msra.mxu0 0
    %943 = vmatprep.subr.bf16.mxu0 0
    %944 = vmatpush1.bf16.msra.mxu0 0
    %945 = vmatprep.subr.bf16.mxu0 0
    %946 = vmatpush1.bf16.msra.mxu0 0
    %947 = vmatprep.subr.bf16.mxu0 0
    %948 = vmatpush1.bf16.msra.mxu0 0
    %949 = vmatprep.mubr.bf16.mxu0 0
    %950 = vmatmul.mubr.bf16.gmra.mrb[0].mxu0 %v555
    %v951 = vpop.f32.mrb[0].mxu0
    %v952 = vadd.f32 %v783, %v951
    %v953 = vpop.f32.mrb[0].mxu0
    %v954 = vpop.f32.mrb[0].mxu0
    %v955 = vpop.f32.mrb[0].mxu0
    %956 = vdwg.mxu0
    %957 = vmatprep.subr.bf16.mxu0 0
    %958 = vmatpush1.bf16.msra.mxu0 %v793
    %959 = vmatprep.subr.bf16.mxu0 0
    %960 = vmatpush1.bf16.msra.mxu0 %v794
    %961 = vmatprep.subr.bf16.mxu0 0
    %962 = vmatpush1.bf16.msra.mxu0 0
    %963 = vmatprep.subr.bf16.mxu0 0
    %964 = vmatpush1.bf16.msra.mxu0 0
    %965 = vmatprep.subr.bf16.mxu0 0
    %966 = vmatpush1.bf16.msra.mxu0 0
    %967 = vmatprep.subr.bf16.mxu0 0
    %968 = vmatpush1.bf16.msra.mxu0 0
    %969 = vmatprep.subr.bf16.mxu0 0
    %970 = vmatpush1.bf16.msra.mxu0 0
    %971 = vmatprep.subr.bf16.mxu0 0
    %972 = vmatpush1.bf16.msra.mxu0 0
    %973 = vmatprep.subr.bf16.mxu0 0
    %974 = vmatpush1.bf16.msra.mxu0 0
    %975 = vmatprep.subr.bf16.mxu0 0
    %976 = vmatpush1.bf16.msra.mxu0 0
    %977 = vmatprep.subr.bf16.mxu0 0
    %978 = vmatpush1.bf16.msra.mxu0 0
    %979 = vmatprep.subr.bf16.mxu0 0
    %980 = vmatpush1.bf16.msra.mxu0 0
    %981 = vmatprep.subr.bf16.mxu0 0
    %982 = vmatpush1.bf16.msra.mxu0 0
    %983 = vmatprep.subr.bf16.mxu0 0
    %984 = vmatpush1.bf16.msra.mxu0 0
    %985 = vmatprep.subr.bf16.mxu0 0
    %986 = vmatpush1.bf16.msra.mxu0 0
    %987 = vmatprep.subr.bf16.mxu0 0
    %988 = vmatpush1.bf16.msra.mxu0 0
    %989 = vmatprep.mubr.bf16.mxu0 0
    %990 = vmatmul.mubr.bf16.gmra.mrb[0].mxu0 %v628
    %v991 = vpop.f32.mrb[0].mxu0
    %v992 = vadd.f32 %v783, %v991
    %v993 = vpop.f32.mrb[0].mxu0
    %v994 = vpop.f32.mrb[0].mxu0
    %v995 = vpop.f32.mrb[0].mxu0
    %996 = vdwg.mxu0
    %997 = vmatprep.subr.bf16.mxu0 0
    %998 = vmatpush1.bf16.msra.mxu0 %v793
    %999 = vmatprep.subr.bf16.mxu0 0
    %1000 = vmatpush1.bf16.msra.mxu0 %v794
    %1001 = vmatprep.subr.bf16.mxu0 0
    %1002 = vmatpush1.bf16.msra.mxu0 0
    %1003 = vmatprep.subr.bf16.mxu0 0
    %1004 = vmatpush1.bf16.msra.mxu0 0
    %1005 = vmatprep.subr.bf16.mxu0 0
    %1006 = vmatpush1.bf16.msra.mxu0 0
    %1007 = vmatprep.subr.bf16.mxu0 0
    %1008 = vmatpush1.bf16.msra.mxu0 0
    %1009 = vmatprep.subr.bf16.mxu0 0
    %1010 = vmatpush1.bf16.msra.mxu0 0
    %1011 = vmatprep.subr.bf16.mxu0 0
    %1012 = vmatpush1.bf16.msra.mxu0 0
    %1013 = vmatprep.subr.bf16.mxu0 0
    %1014 = vmatpush1.bf16.msra.mxu0 0
    %1015 = vmatprep.subr.bf16.mxu0 0
    %1016 = vmatpush1.bf16.msra.mxu0 0
    %1017 = vmatprep.subr.bf16.mxu0 0
    %1018 = vmatpush1.bf16.msra.mxu0 0
    %1019 = vmatprep.subr.bf16.mxu0 0
    %1020 = vmatpush1.bf16.msra.mxu0 0
    %1021 = vmatprep.subr.bf16.mxu0 0
    %1022 = vmatpush1.bf16.msra.mxu0 0
    %1023 = vmatprep.subr.bf16.mxu0 0
    %1024 = vmatpush1.bf16.msra.mxu0 0
    %1025 = vmatprep.subr.bf16.mxu0 0
    %1026 = vmatpush1.bf16.msra.mxu0 0
    %1027 = vmatprep.subr.bf16.mxu0 0
    %1028 = vmatpush1.bf16.msra.mxu0 0
    %1029 = vmatprep.mubr.bf16.mxu0 0
    %1030 = vmatmul.mubr.bf16.gmra.mrb[0].mxu0 %v701
    %v1031 = vpop.f32.mrb[0].mxu0
    %v1032 = vadd.f32 %v783, %v1031
    %v1033 = vpop.f32.mrb[0].mxu0
    %v1034 = vpop.f32.mrb[0].mxu0
    %v1035 = vpop.f32.mrb[0].mxu0
    %1036 = vdwg.mxu0
    %v1037 = vpack.c.bf16 %v768, %v768
    %1039 = vrot.lane.b32.xlu0 %v1037, 96
    %v1040 = vpop.permute.xlu0 %1039
    %v1042 = vsel %vm334, %v1040, 0
    %1044 = vmatprep.subr.bf16.mxu0 0
    %1045 = vmatpush1.bf16.msra.mxu0 %v793
    %1046 = vmatprep.subr.bf16.mxu0 0
    %1047 = vmatpush1.bf16.msra.mxu0 %v794
    %1048 = vmatprep.subr.bf16.mxu0 0
    %1049 = vmatpush1.bf16.msra.mxu0 0
    %1050 = vmatprep.subr.bf16.mxu0 0
    %1051 = vmatpush1.bf16.msra.mxu0 0
    %1052 = vmatprep.subr.bf16.mxu0 0
    %1053 = vmatpush1.bf16.msra.mxu0 0
    %1054 = vmatprep.subr.bf16.mxu0 0
    %1055 = vmatpush1.bf16.msra.mxu0 0
    %1056 = vmatprep.subr.bf16.mxu0 0
    %1057 = vmatpush1.bf16.msra.mxu0 0
    %1058 = vmatprep.subr.bf16.mxu0 0
    %1059 = vmatpush1.bf16.msra.mxu0 0
    %1060 = vmatprep.subr.bf16.mxu0 0
    %1061 = vmatpush1.bf16.msra.mxu0 0
    %1062 = vmatprep.subr.bf16.mxu0 0
    %1063 = vmatpush1.bf16.msra.mxu0 0
    %1064 = vmatprep.subr.bf16.mxu0 0
    %1065 = vmatpush1.bf16.msra.mxu0 0
    %1066 = vmatprep.subr.bf16.mxu0 0
    %1067 = vmatpush1.bf16.msra.mxu0 0
    %1068 = vmatprep.subr.bf16.mxu0 0
    %1069 = vmatpush1.bf16.msra.mxu0 0
    %1070 = vmatprep.subr.bf16.mxu0 0
    %1071 = vmatpush1.bf16.msra.mxu0 0
    %1072 = vmatprep.subr.bf16.mxu0 0
    %1073 = vmatpush1.bf16.msra.mxu0 0
    %1074 = vmatprep.subr.bf16.mxu0 0
    %1075 = vmatpush1.bf16.msra.mxu0 0
    %1076 = vmatprep.mubr.bf16.mxu0 0
    %1077 = vmatmul.mubr.bf16.gmra.mrb[0].mxu0 %v1042
    %v1078 = vpop.f32.mrb[0].mxu0
    %v1079 = vadd.f32 %v783, %v1078
    %v1080 = vpop.f32.mrb[0].mxu0
    %v1081 = vpop.f32.mrb[0].mxu0
    %v1082 = vpop.f32.mrb[0].mxu0
    %1083 = vdwg.mxu0
    %v1085 = vlaneseq
    %v1086 = vshrl.u32 %v1085, 7
    %v1087 = vsub.s32 0, %v1086
    %v1088 = vrot.slane %v770, %v1087
    %v1090 = vadd.f32 %v832, %v1088
    %v1091 = vxor.u32 %v1090, 2147483648
    %v1092 = vmul.f32 %v1091, 1.442695
    %v1093 = vpow.pop %v1092
    %v1094 = vadd.f32 %v1093, 1.0
    %v1095 = vrcp.pop %v1094
    %v1096 = vmul.f32 1.0, %v1095
    %1097 = vrot.lane.b32.xlu0 %v1088, 64
    %v1098 = vpop.permute.xlu0 %1097
    %v1100 = vmul.f32 %v1096, %v1098
    %1102 = vrot.lane.b32.xlu0 %v1100, 64
    %v1103 = vpop.permute.xlu0 %1102
    %v1105 = vadd.f32 %v832, %v1103
    %v1106 = vtanh.pop %v1105
    %v1107 = vsub.f32 1.0, %v1096
    %1109 = vrot.lane.b32.xlu0 %v1106, 96
    %v1110 = vpop.permute.xlu0 %1109
    %v1112 = vmul.f32 %v1107, %v1110
    %v1113 = vpack.c.bf16 %v1112, %v1112
    %1115 = vrot.lane.b32.xlu0 %v1113, 96
    %v1116 = vpop.permute.xlu0 %1115
    %v1121 = vunpack.c.l.b16 %v771
    %v1122 = vunpack.c.l.b16 %v772
    %v1123 = vunpack.c.l.b16 %v773
    %v1124 = vunpack.c.l.b16 %v774
    %v1125 = vpack.c.b16 %v1122, %v1121
    %v1126 = vpack.c.b16 %v1124, %v1123
    %v1130 = vsel %vm334, %v1116, 0
    %1132 = vmatprep.subr.bf16.mxu0 0
    %1133 = vmatpush1.bf16.msra.mxu0 %v1125
    %1134 = vmatprep.subr.bf16.mxu0 0
    %1135 = vmatpush1.bf16.msra.mxu0 %v1126
    %1136 = vmatprep.subr.bf16.mxu0 0
    %1137 = vmatpush1.bf16.msra.mxu0 0
    %1138 = vmatprep.subr.bf16.mxu0 0
    %1139 = vmatpush1.bf16.msra.mxu0 0
    %1140 = vmatprep.subr.bf16.mxu0 0
    %1141 = vmatpush1.bf16.msra.mxu0 0
    %1142 = vmatprep.subr.bf16.mxu0 0
    %1143 = vmatpush1.bf16.msra.mxu0 0
    %1144 = vmatprep.subr.bf16.mxu0 0
    %1145 = vmatpush1.bf16.msra.mxu0 0
    %1146 = vmatprep.subr.bf16.mxu0 0
    %1147 = vmatpush1.bf16.msra.mxu0 0
    %1148 = vmatprep.subr.bf16.mxu0 0
    %1149 = vmatpush1.bf16.msra.mxu0 0
    %1150 = vmatprep.subr.bf16.mxu0 0
    %1151 = vmatpush1.bf16.msra.mxu0 0
    %1152 = vmatprep.subr.bf16.mxu0 0
    %1153 = vmatpush1.bf16.msra.mxu0 0
    %1154 = vmatprep.subr.bf16.mxu0 0
    %1155 = vmatpush1.bf16.msra.mxu0 0
    %1156 = vmatprep.subr.bf16.mxu0 0
    %1157 = vmatpush1.bf16.msra.mxu0 0
    %1158 = vmatprep.subr.bf16.mxu0 0
    %1159 = vmatpush1.bf16.msra.mxu0 0
    %1160 = vmatprep.subr.bf16.mxu0 0
    %1161 = vmatpush1.bf16.msra.mxu0 0
    %1162 = vmatprep.subr.bf16.mxu0 0
    %1163 = vmatpush1.bf16.msra.mxu0 0
    %1164 = vmatprep.mubr.bf16.mxu0 0
    %1165 = vmatmul.mubr.bf16.gmra.mrb[0].mxu0 %v1130
    %v1166 = vpop.f32.mrb[0].mxu0
    %v1167 = vadd.f32 %v1088, %v1166
    %v1168 = vpop.f32.mrb[0].mxu0
    %v1169 = vpop.f32.mrb[0].mxu0
    %v1170 = vpop.f32.mrb[0].mxu0
    %1171 = vdwg.mxu0
    %v1172 = vadd.f32 %v872, %v1167
    %v1173 = vxor.u32 %v1172, 2147483648
    %v1174 = vmul.f32 %v1173, 1.442695
    %v1175 = vpow.pop %v1174
    %v1176 = vadd.f32 %v1175, 1.0
    %v1177 = vrcp.pop %v1176
    %v1178 = vmul.f32 1.0, %v1177
    %1180 = vrot.lane.b32.xlu0 %v1167, 64
    %v1181 = vpop.permute.xlu0 %1180
    %v1183 = vmul.f32 %v1178, %v1181
    %1185 = vrot.lane.b32.xlu0 %v1183, 64
    %v1186 = vpop.permute.xlu0 %1185
    %v1188 = vadd.f32 %v872, %v1186
    %v1189 = vtanh.pop %v1188
    %v1190 = vsub.f32 1.0, %v1178
    %1192 = vrot.lane.b32.xlu0 %v1189, 96
    %v1193 = vpop.permute.xlu0 %1192
    %v1195 = vmul.f32 %v1190, %v1193
    %v1196 = vmul.f32 %v1178, %v1112
    %v1197 = vadd.f32 %v1195, %v1196
    %v1198 = vpack.c.bf16 %v1197, %v1197
    %1200 = vrot.lane.b32.xlu0 %v1198, 96
    %v1201 = vpop.permute.xlu0 %1200
    %v1203 = vsel %vm334, %v1201, 0
    %1205 = vmatprep.subr.bf16.mxu0 0
    %1206 = vmatpush1.bf16.msra.mxu0 %v1125
    %1207 = vmatprep.subr.bf16.mxu0 0
    %1208 = vmatpush1.bf16.msra.mxu0 %v1126
    %1209 = vmatprep.subr.bf16.mxu0 0
    %1210 = vmatpush1.bf16.msra.mxu0 0
    %1211 = vmatprep.subr.bf16.mxu0 0
    %1212 = vmatpush1.bf16.msra.mxu0 0
    %1213 = vmatprep.subr.bf16.mxu0 0
    %1214 = vmatpush1.bf16.msra.mxu0 0
    %1215 = vmatprep.subr.bf16.mxu0 0
    %1216 = vmatpush1.bf16.msra.mxu0 0
    %1217 = vmatprep.subr.bf16.mxu0 0
    %1218 = vmatpush1.bf16.msra.mxu0 0
    %1219 = vmatprep.subr.bf16.mxu0 0
    %1220 = vmatpush1.bf16.msra.mxu0 0
    %1221 = vmatprep.subr.bf16.mxu0 0
    %1222 = vmatpush1.bf16.msra.mxu0 0
    %1223 = vmatprep.subr.bf16.mxu0 0
    %1224 = vmatpush1.bf16.msra.mxu0 0
    %1225 = vmatprep.subr.bf16.mxu0 0
    %1226 = vmatpush1.bf16.msra.mxu0 0
    %1227 = vmatprep.subr.bf16.mxu0 0
    %1228 = vmatpush1.bf16.msra.mxu0 0
    %1229 = vmatprep.subr.bf16.mxu0 0
    %1230 = vmatpush1.bf16.msra.mxu0 0
    %1231 = vmatprep.subr.bf16.mxu0 0
    %1232 = vmatpush1.bf16.msra.mxu0 0
    %1233 = vmatprep.subr.bf16.mxu0 0
    %1234 = vmatpush1.bf16.msra.mxu0 0
    %1235 = vmatprep.subr.bf16.mxu0 0
    %1236 = vmatpush1.bf16.msra.mxu0 0
    %1237 = vmatprep.mubr.bf16.mxu0 0
    %1238 = vmatmul.mubr.bf16.gmra.mrb[0].mxu0 %v1203
    %v1239 = vpop.f32.mrb[0].mxu0
    %v1240 = vadd.f32 %v1088, %v1239
    %v1241 = vpop.f32.mrb[0].mxu0
    %v1242 = vpop.f32.mrb[0].mxu0
    %v1243 = vpop.f32.mrb[0].mxu0
    %1244 = vdwg.mxu0
    %v1245 = vadd.f32 %v912, %v1240
    %v1246 = vxor.u32 %v1245, 2147483648
    %v1247 = vmul.f32 %v1246, 1.442695
    %v1248 = vpow.pop %v1247
    %v1249 = vadd.f32 %v1248, 1.0
    %v1250 = vrcp.pop %v1249
    %v1251 = vmul.f32 1.0, %v1250
    %1253 = vrot.lane.b32.xlu0 %v1240, 64
    %v1254 = vpop.permute.xlu0 %1253
    %v1256 = vmul.f32 %v1251, %v1254
    %1258 = vrot.lane.b32.xlu0 %v1256, 64
    %v1259 = vpop.permute.xlu0 %1258
    %v1261 = vadd.f32 %v912, %v1259
    %v1262 = vtanh.pop %v1261
    %v1263 = vsub.f32 1.0, %v1251
    %1265 = vrot.lane.b32.xlu0 %v1262, 96
    %v1266 = vpop.permute.xlu0 %1265
    %v1268 = vmul.f32 %v1263, %v1266
    %v1269 = vmul.f32 %v1251, %v1197
    %v1270 = vadd.f32 %v1268, %v1269
    %v1271 = vpack.c.bf16 %v1270, %v1270
    %1273 = vrot.lane.b32.xlu0 %v1271, 96
    %v1274 = vpop.permute.xlu0 %1273
    %v1276 = vsel %vm334, %v1274, 0
    %1278 = vmatprep.subr.bf16.mxu0 0
    %1279 = vmatpush1.bf16.msra.mxu0 %v1125
    %1280 = vmatprep.subr.bf16.mxu0 0
    %1281 = vmatpush1.bf16.msra.mxu0 %v1126
    %1282 = vmatprep.subr.bf16.mxu0 0
    %1283 = vmatpush1.bf16.msra.mxu0 0
    %1284 = vmatprep.subr.bf16.mxu0 0
    %1285 = vmatpush1.bf16.msra.mxu0 0
    %1286 = vmatprep.subr.bf16.mxu0 0
    %1287 = vmatpush1.bf16.msra.mxu0 0
    %1288 = vmatprep.subr.bf16.mxu0 0
    %1289 = vmatpush1.bf16.msra.mxu0 0
    %1290 = vmatprep.subr.bf16.mxu0 0
    %1291 = vmatpush1.bf16.msra.mxu0 0
    %1292 = vmatprep.subr.bf16.mxu0 0
    %1293 = vmatpush1.bf16.msra.mxu0 0
    %1294 = vmatprep.subr.bf16.mxu0 0
    %1295 = vmatpush1.bf16.msra.mxu0 0
    %1296 = vmatprep.subr.bf16.mxu0 0
    %1297 = vmatpush1.bf16.msra.mxu0 0
    %1298 = vmatprep.subr.bf16.mxu0 0
    %1299 = vmatpush1.bf16.msra.mxu0 0
    %1300 = vmatprep.subr.bf16.mxu0 0
    %1301 = vmatpush1.bf16.msra.mxu0 0
    %1302 = vmatprep.subr.bf16.mxu0 0
    %1303 = vmatpush1.bf16.msra.mxu0 0
    %1304 = vmatprep.subr.bf16.mxu0 0
    %1305 = vmatpush1.bf16.msra.mxu0 0
    %1306 = vmatprep.subr.bf16.mxu0 0
    %1307 = vmatpush1.bf16.msra.mxu0 0
    %1308 = vmatprep.subr.bf16.mxu0 0
    %1309 = vmatpush1.bf16.msra.mxu0 0
    %1310 = vmatprep.mubr.bf16.mxu0 0
    %1311 = vmatmul.mubr.bf16.gmra.mrb[0].mxu0 %v1276
    %v1312 = vpop.f32.mrb[0].mxu0
    %v1313 = vadd.f32 %v1088, %v1312
    %v1314 = vpop.f32.mrb[0].mxu0
    %v1315 = vpop.f32.mrb[0].mxu0
    %v1316 = vpop.f32.mrb[0].mxu0
    %1317 = vdwg.mxu0
    %v1318 = vadd.f32 %v952, %v1313
    %v1319 = vxor.u32 %v1318, 2147483648
    %v1320 = vmul.f32 %v1319, 1.442695
    %v1321 = vpow.pop %v1320
    %v1322 = vadd.f32 %v1321, 1.0
    %v1323 = vrcp.pop %v1322
    %v1324 = vmul.f32 1.0, %v1323
    %1326 = vrot.lane.b32.xlu0 %v1313, 64
    %v1327 = vpop.permute.xlu0 %1326
    %v1329 = vmul.f32 %v1324, %v1327
    %1331 = vrot.lane.b32.xlu0 %v1329, 64
    %v1332 = vpop.permute.xlu0 %1331
    %v1334 = vadd.f32 %v952, %v1332
    %v1335 = vtanh.pop %v1334
    %v1336 = vsub.f32 1.0, %v1324
    %1338 = vrot.lane.b32.xlu0 %v1335, 96
    %v1339 = vpop.permute.xlu0 %1338
    %v1341 = vmul.f32 %v1336, %v1339
    %v1342 = vmul.f32 %v1324, %v1270
    %v1343 = vadd.f32 %v1341, %v1342
    %v1344 = vpack.c.bf16 %v1343, %v1343
    %1346 = vrot.lane.b32.xlu0 %v1344, 96
    %v1347 = vpop.permute.xlu0 %1346
    %v1349 = vsel %vm334, %v1347, 0
    %1351 = vmatprep.subr.bf16.mxu0 0
    %1352 = vmatpush1.bf16.msra.mxu0 %v1125
    %1353 = vmatprep.subr.bf16.mxu0 0
    %1354 = vmatpush1.bf16.msra.mxu0 %v1126
    %1355 = vmatprep.subr.bf16.mxu0 0
    %1356 = vmatpush1.bf16.msra.mxu0 0
    %1357 = vmatprep.subr.bf16.mxu0 0
    %1358 = vmatpush1.bf16.msra.mxu0 0
    %1359 = vmatprep.subr.bf16.mxu0 0
    %1360 = vmatpush1.bf16.msra.mxu0 0
    %1361 = vmatprep.subr.bf16.mxu0 0
    %1362 = vmatpush1.bf16.msra.mxu0 0
    %1363 = vmatprep.subr.bf16.mxu0 0
    %1364 = vmatpush1.bf16.msra.mxu0 0
    %1365 = vmatprep.subr.bf16.mxu0 0
    %1366 = vmatpush1.bf16.msra.mxu0 0
    %1367 = vmatprep.subr.bf16.mxu0 0
    %1368 = vmatpush1.bf16.msra.mxu0 0
    %1369 = vmatprep.subr.bf16.mxu0 0
    %1370 = vmatpush1.bf16.msra.mxu0 0
    %1371 = vmatprep.subr.bf16.mxu0 0
    %1372 = vmatpush1.bf16.msra.mxu0 0
    %1373 = vmatprep.subr.bf16.mxu0 0
    %1374 = vmatpush1.bf16.msra.mxu0 0
    %1375 = vmatprep.subr.bf16.mxu0 0
    %1376 = vmatpush1.bf16.msra.mxu0 0
    %1377 = vmatprep.subr.bf16.mxu0 0
    %1378 = vmatpush1.bf16.msra.mxu0 0
    %1379 = vmatprep.subr.bf16.mxu0 0
    %1380 = vmatpush1.bf16.msra.mxu0 0
    %1381 = vmatprep.subr.bf16.mxu0 0
    %1382 = vmatpush1.bf16.msra.mxu0 0
    %1383 = vmatprep.mubr.bf16.mxu0 0
    %1384 = vmatmul.mubr.bf16.gmra.mrb[0].mxu0 %v1349
    %v1385 = vpop.f32.mrb[0].mxu0
    %v1386 = vadd.f32 %v1088, %v1385
    %v1387 = vpop.f32.mrb[0].mxu0
    %v1388 = vpop.f32.mrb[0].mxu0
    %v1389 = vpop.f32.mrb[0].mxu0
    %1390 = vdwg.mxu0
    %v1391 = vadd.f32 %v992, %v1386
    %v1392 = vxor.u32 %v1391, 2147483648
    %v1393 = vmul.f32 %v1392, 1.442695
    %v1394 = vpow.pop %v1393
    %v1395 = vadd.f32 %v1394, 1.0
    %v1396 = vrcp.pop %v1395
    %v1397 = vmul.f32 1.0, %v1396
    %1399 = vrot.lane.b32.xlu0 %v1386, 64
    %v1400 = vpop.permute.xlu0 %1399
    %v1402 = vmul.f32 %v1397, %v1400
    %1404 = vrot.lane.b32.xlu0 %v1402, 64
    %v1405 = vpop.permute.xlu0 %1404
    %v1407 = vadd.f32 %v992, %v1405
    %v1408 = vtanh.pop %v1407
    %v1409 = vsub.f32 1.0, %v1397
    %1411 = vrot.lane.b32.xlu0 %v1408, 96
    %v1412 = vpop.permute.xlu0 %1411
    %v1414 = vmul.f32 %v1409, %v1412
    %v1415 = vmul.f32 %v1397, %v1343
    %v1416 = vadd.f32 %v1414, %v1415
    %v1417 = vpack.c.bf16 %v1416, %v1416
    %1419 = vrot.lane.b32.xlu0 %v1417, 96
    %v1420 = vpop.permute.xlu0 %1419
    %v1422 = vsel %vm334, %v1420, 0
    %1424 = vmatprep.subr.bf16.mxu0 0
    %1425 = vmatpush1.bf16.msra.mxu0 %v1125
    %1426 = vmatprep.subr.bf16.mxu0 0
    %1427 = vmatpush1.bf16.msra.mxu0 %v1126
    %1428 = vmatprep.subr.bf16.mxu0 0
    %1429 = vmatpush1.bf16.msra.mxu0 0
    %1430 = vmatprep.subr.bf16.mxu0 0
    %1431 = vmatpush1.bf16.msra.mxu0 0
    %1432 = vmatprep.subr.bf16.mxu0 0
    %1433 = vmatpush1.bf16.msra.mxu0 0
    %1434 = vmatprep.subr.bf16.mxu0 0
    %1435 = vmatpush1.bf16.msra.mxu0 0
    %1436 = vmatprep.subr.bf16.mxu0 0
    %1437 = vmatpush1.bf16.msra.mxu0 0
    %1438 = vmatprep.subr.bf16.mxu0 0
    %1439 = vmatpush1.bf16.msra.mxu0 0
    %1440 = vmatprep.subr.bf16.mxu0 0
    %1441 = vmatpush1.bf16.msra.mxu0 0
    %1442 = vmatprep.subr.bf16.mxu0 0
    %1443 = vmatpush1.bf16.msra.mxu0 0
    %1444 = vmatprep.subr.bf16.mxu0 0
    %1445 = vmatpush1.bf16.msra.mxu0 0
    %1446 = vmatprep.subr.bf16.mxu0 0
    %1447 = vmatpush1.bf16.msra.mxu0 0
    %1448 = vmatprep.subr.bf16.mxu0 0
    %1449 = vmatpush1.bf16.msra.mxu0 0
    %1450 = vmatprep.subr.bf16.mxu0 0
    %1451 = vmatpush1.bf16.msra.mxu0 0
    %1452 = vmatprep.subr.bf16.mxu0 0
    %1453 = vmatpush1.bf16.msra.mxu0 0
    %1454 = vmatprep.subr.bf16.mxu0 0
    %1455 = vmatpush1.bf16.msra.mxu0 0
    %1456 = vmatprep.mubr.bf16.mxu0 0
    %1457 = vmatmul.mubr.bf16.gmra.mrb[0].mxu0 %v1422
    %v1458 = vpop.f32.mrb[0].mxu0
    %v1459 = vadd.f32 %v1088, %v1458
    %v1460 = vpop.f32.mrb[0].mxu0
    %v1461 = vpop.f32.mrb[0].mxu0
    %v1462 = vpop.f32.mrb[0].mxu0
    %1463 = vdwg.mxu0
    %v1464 = vadd.f32 %v1032, %v1459
    %v1465 = vxor.u32 %v1464, 2147483648
    %v1466 = vmul.f32 %v1465, 1.442695
    %v1467 = vpow.pop %v1466
    %v1468 = vadd.f32 %v1467, 1.0
    %v1469 = vrcp.pop %v1468
    %v1470 = vmul.f32 1.0, %v1469
    %1472 = vrot.lane.b32.xlu0 %v1459, 64
    %v1473 = vpop.permute.xlu0 %1472
    %v1475 = vmul.f32 %v1470, %v1473
    %1477 = vrot.lane.b32.xlu0 %v1475, 64
    %v1478 = vpop.permute.xlu0 %1477
    %v1480 = vadd.f32 %v1032, %v1478
    %v1481 = vtanh.pop %v1480
    %v1482 = vsub.f32 1.0, %v1470
    %1484 = vrot.lane.b32.xlu0 %v1481, 96
    %v1485 = vpop.permute.xlu0 %1484
    %v1487 = vmul.f32 %v1482, %v1485
    %v1488 = vmul.f32 %v1470, %v1416
    %v1489 = vadd.f32 %v1487, %v1488
    %v1490 = vpack.c.bf16 %v1489, %v1489
    %1492 = vrot.lane.b32.xlu0 %v1490, 96
    %v1493 = vpop.permute.xlu0 %1492
    %v1495 = vsel %vm334, %v1493, 0
    %1497 = vmatprep.subr.bf16.mxu0 0
    %1498 = vmatpush1.bf16.msra.mxu0 %v1125
    %1499 = vmatprep.subr.bf16.mxu0 0
    %1500 = vmatpush1.bf16.msra.mxu0 %v1126
    %1501 = vmatprep.subr.bf16.mxu0 0
    %1502 = vmatpush1.bf16.msra.mxu0 0
    %1503 = vmatprep.subr.bf16.mxu0 0
    %1504 = vmatpush1.bf16.msra.mxu0 0
    %1505 = vmatprep.subr.bf16.mxu0 0
    %1506 = vmatpush1.bf16.msra.mxu0 0
    %1507 = vmatprep.subr.bf16.mxu0 0
    %1508 = vmatpush1.bf16.msra.mxu0 0
    %1509 = vmatprep.subr.bf16.mxu0 0
    %1510 = vmatpush1.bf16.msra.mxu0 0
    %1511 = vmatprep.subr.bf16.mxu0 0
    %1512 = vmatpush1.bf16.msra.mxu0 0
    %1513 = vmatprep.subr.bf16.mxu0 0
    %1514 = vmatpush1.bf16.msra.mxu0 0
    %1515 = vmatprep.subr.bf16.mxu0 0
    %1516 = vmatpush1.bf16.msra.mxu0 0
    %1517 = vmatprep.subr.bf16.mxu0 0
    %1518 = vmatpush1.bf16.msra.mxu0 0
    %1519 = vmatprep.subr.bf16.mxu0 0
    %1520 = vmatpush1.bf16.msra.mxu0 0
    %1521 = vmatprep.subr.bf16.mxu0 0
    %1522 = vmatpush1.bf16.msra.mxu0 0
    %1523 = vmatprep.subr.bf16.mxu0 0
    %1524 = vmatpush1.bf16.msra.mxu0 0
    %1525 = vmatprep.subr.bf16.mxu0 0
    %1526 = vmatpush1.bf16.msra.mxu0 0
    %1527 = vmatprep.subr.bf16.mxu0 0
    %1528 = vmatpush1.bf16.msra.mxu0 0
    %1529 = vmatprep.mubr.bf16.mxu0 0
    %1530 = vmatmul.mubr.bf16.gmra.mrb[0].mxu0 %v1495
    %v1531 = vpop.f32.mrb[0].mxu0
    %v1532 = vadd.f32 %v1088, %v1531
    %v1533 = vpop.f32.mrb[0].mxu0
    %v1534 = vpop.f32.mrb[0].mxu0
    %v1535 = vpop.f32.mrb[0].mxu0
    %1536 = vdwg.mxu0
    %v1537 = vadd.f32 %v1079, %v1532
    %v1538 = vxor.u32 %v1537, 2147483648
    %v1539 = vmul.f32 %v1538, 1.442695
    %v1540 = vpow.pop %v1539
    %v1541 = vadd.f32 %v1540, 1.0
    %v1542 = vrcp.pop %v1541
    %v1543 = vmul.f32 1.0, %v1542
    %1545 = vrot.lane.b32.xlu0 %v1532, 64
    %v1546 = vpop.permute.xlu0 %1545
    %v1548 = vmul.f32 %v1543, %v1546
    %1550 = vrot.lane.b32.xlu0 %v1548, 64
    %v1551 = vpop.permute.xlu0 %1550
    %v1553 = vadd.f32 %v1079, %v1551
    %v1554 = vtanh.pop %v1553
    %v1555 = vsub.f32 1.0, %v1543
    %1557 = vrot.lane.b32.xlu0 %v1554, 96
    %v1558 = vpop.permute.xlu0 %1557
    %v1560 = vmul.f32 %v1555, %v1558
    %v1561 = vmul.f32 %v1543, %v1489
    %v1562 = vadd.f32 %v1560, %v1561
    %v1565 = vunpack.c.l.s4 1983009808
    %v1566 = vunpack.c.0.s8 %v1565
    %v1567 = vlaneseq
    %v1568 = vshrl.u32 %v1567, 7
    %v1569 = vsub.s32 %v1566, %v1568
    %v1570 = vrot.slane %v1112, %v1569
    %1571 = vrot.lane.b32.xlu0 %v1570, 96
    %v1572 = vpop.permute.xlu0 %1571
    %vm1574 = vcmask 254976
    %1575 = vst.msk [vmem:[#allocation2] sm:$0x3] %vm1574, %v1572
    %vm1576 = vcmask 517376
    %1577 = vst.msk [vmem:[#allocation2] sm:$0x3] %vm1576, %v1197
    %v1580 = vunpack.c.l.s4 1983009808
    %v1581 = vunpack.c.0.s8 %v1580
    %v1582 = vlaneseq
    %v1583 = vshrl.u32 %v1582, 7
    %v1584 = vsub.s32 %v1581, %v1583
    %v1585 = vrot.slane %v1270, %v1584
    %1586 = vrot.lane.b32.xlu0 %v1585, 32
    %v1587 = vpop.permute.xlu0 %1586
    %vm1589 = vcmask 779776
    %1590 = vst.msk [vmem:[#allocation2] sm:$0x3] %vm1589, %v1587
    %v1593 = vunpack.c.l.s4 1983009808
    %v1594 = vunpack.c.0.s8 %v1593
    %v1595 = vlaneseq
    %v1596 = vshrl.u32 %v1595, 7
    %v1597 = vsub.s32 %v1594, %v1596
    %v1598 = vrot.slane %v1343, %v1597
    %1599 = vrot.lane.b32.xlu0 %v1598, 64
    %v1600 = vpop.permute.xlu0 %1599
    %vm1602 = vcmask 1042176
    %1603 = vst.msk [vmem:[#allocation2] sm:$0x3] %vm1602, %v1600
    %v1606 = vunpack.c.l.s4 1983009808
    %v1607 = vunpack.c.0.s8 %v1606
    %v1608 = vlaneseq
    %v1609 = vshrl.u32 %v1608, 7
    %v1610 = vsub.s32 %v1607, %v1609
    %v1611 = vrot.slane %v1416, %v1610
    %1612 = vrot.lane.b32.xlu0 %v1611, 96
    %v1613 = vpop.permute.xlu0 %1612
    %1615 = vst.msk [vmem:[#allocation2 + $0x2] sm:$0x3] %vm1574, %v1613
    %1616 = vst.msk [vmem:[#allocation2 + $0x2] sm:$0x3] %vm1576, %v1489
    %v1619 = vunpack.c.l.s4 1983009808
    %v1620 = vunpack.c.0.s8 %v1619
    %v1621 = vlaneseq
    %v1622 = vshrl.u32 %v1621, 7
    %v1623 = vsub.s32 %v1620, %v1622
    %v1624 = vrot.slane %v1562, %v1623
    %1625 = vrot.lane.b32.xlu0 %v1624, 32
    %v1626 = vpop.permute.xlu0 %1625
    %1628 = vst.msk [vmem:[#allocation2 + $0x2] sm:$0x3] %vm1589, %v1626
    %v1629 = vld [vmem:[#allocation2] sm:$0xf]
    %v1630 = vld [vmem:[#allocation16] sm:$0xff]
    %v1631 = vld [vmem:[#allocation16 + $0x8] sm:$0xff]
    %v1632 = vld [vmem:[#allocation16 + $0x10] sm:$0xff]
    %v1633 = vld [vmem:[#allocation16 + $0x18] sm:$0xff]
    %v1634 = vld [vmem:[#allocation16 + $0x20] sm:$0xff]
    %v1635 = vld [vmem:[#allocation16 + $0x28] sm:$0xff]
    %v1636 = vld [vmem:[#allocation16 + $0x30] sm:$0xff]
    %v1637 = vld [vmem:[#allocation16 + $0x38] sm:$0xff]
    %v1638 = vld [vmem:[#allocation16 + $0x40] sm:$0xff]
    %v1639 = vld [vmem:[#allocation16 + $0x48] sm:$0xff]
    %v1640 = vld [vmem:[#allocation16 + $0x50] sm:$0xff]
    %v1641 = vld [vmem:[#allocation16 + $0x58] sm:$0xff]
    %v1642 = vld [vmem:[#allocation16 + $0x60] sm:$0xff]
    %v1643 = vld [vmem:[#allocation16 + $0x68] sm:$0xff]
    %v1644 = vld [vmem:[#allocation16 + $0x70] sm:$0xff]
    %v1645 = vld [vmem:[#allocation16 + $0x78] sm:$0xff]
    %v1646 = vld [vmem:[#allocation16 + $0x80] sm:$0xff]
    %v1647 = vld [vmem:[#allocation16 + $0x88] sm:$0xff]
    %v1648 = vld [vmem:[#allocation16 + $0x90] sm:$0xff]
    %v1649 = vld [vmem:[#allocation16 + $0x98] sm:$0xff]
    %v1650 = vld [vmem:[#allocation16 + $0xa0] sm:$0xff]
    %v1651 = vld [vmem:[#allocation16 + $0xa8] sm:$0xff]
    %v1652 = vld [vmem:[#allocation16 + $0xb0] sm:$0xff]
    %v1653 = vld [vmem:[#allocation16 + $0xb8] sm:$0xff]
    %v1654 = vld [vmem:[#allocation16 + $0xc0] sm:$0xff]
    %v1655 = vld [vmem:[#allocation16 + $0xc8] sm:$0xff]
    %v1656 = vld [vmem:[#allocation16 + $0xd0] sm:$0xff]
    %v1657 = vld [vmem:[#allocation16 + $0xd8] sm:$0xff]
    %v1658 = vld [vmem:[#allocation18] sm:$0x1]
    %v1660 = vlaneseq
    %v1661 = vshrl.u32 %v1660, 7
    %v1662 = vsub.s32 0, %v1661
    %v1663 = vrot.slane %v1658, %v1662
    %v1667 = vunpack.c.l.s4 1983009808
    %v1668 = vunpack.c.0.s8 %v1667
    %v1669 = vlaneseq
    %v1670 = vshrl.u32 %v1669, 7
    %v1671 = vsub.s32 %v1668, %v1670
    %v1672 = vrot.slane %v1629, %v1671
    %v1673 = vcombine.high %v1672, %v1672
    %vm1675 = vcmask 785408
    %v1676 = vsel %vm1675, %v1673, 0
    %1678 = vmatprep.subr.mxu0 0.0
    %1679 = vmatpush1.msra.mxu0 %v1630
    %1680 = vmatprep.subr.mxu0 0.0
    %1681 = vmatpush1.msra.mxu0 %v1631
    %1682 = vmatprep.subr.mxu0 0.0
    %1683 = vmatpush1.msra.mxu0 %v1632
    %1684 = vmatprep.subr.mxu0 0.0
    %1685 = vmatpush1.msra.mxu0 %v1633
    %1686 = vmatprep.subr.mxu0 0.0
    %1687 = vmatpush1.msra.mxu0 %v1634
    %1688 = vmatprep.subr.mxu0 0.0
    %1689 = vmatpush1.msra.mxu0 %v1635
    %1690 = vmatprep.subr.mxu0 0.0
    %1691 = vmatpush1.msra.mxu0 %v1636
    %1692 = vmatprep.subr.mxu0 0.0
    %1693 = vmatpush1.msra.mxu0 %v1637
    %1694 = vmatprep.subr.mxu0 0.0
    %1695 = vmatpush1.msra.mxu0 %v1638
    %1696 = vmatprep.subr.mxu0 0.0
    %1697 = vmatpush1.msra.mxu0 %v1639
    %1698 = vmatprep.subr.mxu0 0.0
    %1699 = vmatpush1.msra.mxu0 %v1640
    %1700 = vmatprep.subr.mxu0 0.0
    %1701 = vmatpush1.msra.mxu0 %v1641
    %1702 = vmatprep.subr.mxu0 0.0
    %1703 = vmatpush1.msra.mxu0 %v1642
    %1704 = vmatprep.subr.mxu0 0.0
    %1705 = vmatpush1.msra.mxu0 %v1643
    %1706 = vmatprep.subr.mxu0 0.0
    %1707 = vmatpush1.msra.mxu0 %v1644
    %1708 = vmatprep.subr.mxu0 0.0
    %1709 = vmatpush1.msra.mxu0 %v1645
    %1710 = vmatprep.subr.mxu0 0.0
    %1711 = vmatpush1.msra.mxu0 %v1646
    %1712 = vmatprep.subr.mxu0 0.0
    %1713 = vmatpush1.msra.mxu0 %v1647
    %1714 = vmatprep.subr.mxu0 0.0
    %1715 = vmatpush1.msra.mxu0 %v1648
    %1716 = vmatprep.subr.mxu0 0.0
    %1717 = vmatpush1.msra.mxu0 %v1649
    %1718 = vmatprep.subr.mxu0 0.0
    %1719 = vmatpush1.msra.mxu0 %v1650
    %1720 = vmatprep.subr.mxu0 0.0
    %1721 = vmatpush1.msra.mxu0 %v1651
    %1722 = vmatprep.subr.mxu0 0.0
    %1723 = vmatpush1.msra.mxu0 %v1652
    %1724 = vmatprep.subr.mxu0 0.0
    %1725 = vmatpush1.msra.mxu0 %v1653
    %1726 = vmatprep.subr.mxu0 0.0
    %1727 = vmatpush1.msra.mxu0 %v1654
    %1728 = vmatprep.subr.mxu0 0.0
    %1729 = vmatpush1.msra.mxu0 %v1655
    %1730 = vmatprep.subr.mxu0 0.0
    %1731 = vmatpush1.msra.mxu0 %v1656
    %1732 = vmatprep.subr.mxu0 0.0
    %1733 = vmatpush1.msra.mxu0 %v1657
    %1734 = vmatprep.subr.mxu0 0.0
    %1735 = vmatpush1.msra.mxu0 0.0
    %1736 = vmatprep.subr.mxu0 0.0
    %1737 = vmatpush1.msra.mxu0 0.0
    %1738 = vmatprep.subr.mxu0 0.0
    %1739 = vmatpush1.msra.mxu0 0.0
    %1740 = vmatprep.subr.mxu0 0.0
    %1741 = vmatpush1.msra.mxu0 0.0
    %1742 = vmatprep.mubr.f32.mxu0 %v1676
    %1743 = vmatmul.mubr.f32.gmra.mrb[0].mxu0 %v1672
    %v1744 = vpop.f32.mrb[0].mxu0
    %v1745 = vadd.f32 %v1663, %v1744
    %v1746 = vpop.f32.mrb[0].mxu0
    %1747 = vdwg.mxu0
    %v1748 = vmax.f32 %v1745, 0.0
    %v1749 = vld [vmem:[#allocation19] sm:$0xff]
    %v1750 = vld [vmem:[#allocation19 + $0x8] sm:$0xff]
    %v1751 = vld [vmem:[#allocation19 + $0x10] sm:$0xff]
    %v1752 = vld [vmem:[#allocation19 + $0x18] sm:$0xff]
    %v1753 = vld [vmem:[#allocation21] sm:$0x1]
    %v1755 = vlaneseq
    %v1756 = vshrl.u32 %v1755, 7
    %v1757 = vsub.s32 0, %v1756
    %v1758 = vrot.slane %v1753, %v1757
    %v1761 = vsel %vm334, %v1748, 0
    %1763 = vmatprep.subr.mxu0 0.0
    %1764 = vmatpush1.msra.mxu0 %v1749
    %1765 = vmatprep.subr.mxu0 0.0
    %1766 = vmatpush1.msra.mxu0 %v1750
    %1767 = vmatprep.subr.mxu0 0.0
    %1768 = vmatpush1.msra.mxu0 %v1751
    %1769 = vmatprep.subr.mxu0 0.0
    %1770 = vmatpush1.msra.mxu0 %v1752
    %1771 = vmatprep.subr.mxu0 0.0
    %1772 = vmatpush1.msra.mxu0 0.0
    %1773 = vmatprep.subr.mxu0 0.0
    %1774 = vmatpush1.msra.mxu0 0.0
    %1775 = vmatprep.subr.mxu0 0.0
    %1776 = vmatpush1.msra.mxu0 0.0
    %1777 = vmatprep.subr.mxu0 0.0
    %1778 = vmatpush1.msra.mxu0 0.0
    %1779 = vmatprep.subr.mxu0 0.0
    %1780 = vmatpush1.msra.mxu0 0.0
    %1781 = vmatprep.subr.mxu0 0.0
    %1782 = vmatpush1.msra.mxu0 0.0
    %1783 = vmatprep.subr.mxu0 0.0
    %1784 = vmatpush1.msra.mxu0 0.0
    %1785 = vmatprep.subr.mxu0 0.0
    %1786 = vmatpush1.msra.mxu0 0.0
    %1787 = vmatprep.subr.mxu0 0.0
    %1788 = vmatpush1.msra.mxu0 0.0
    %1789 = vmatprep.subr.mxu0 0.0
    %1790 = vmatpush1.msra.mxu0 0.0
    %1791 = vmatprep.subr.mxu0 0.0
    %1792 = vmatpush1.msra.mxu0 0.0
    %1793 = vmatprep.subr.mxu0 0.0
    %1794 = vmatpush1.msra.mxu0 0.0
    %1795 = vmatprep.subr.mxu0 0.0
    %1796 = vmatpush1.msra.mxu0 0.0
    %1797 = vmatprep.subr.mxu0 0.0
    %1798 = vmatpush1.msra.mxu0 0.0
    %1799 = vmatprep.subr.mxu0 0.0
    %1800 = vmatpush1.msra.mxu0 0.0
    %1801 = vmatprep.subr.mxu0 0.0
    %1802 = vmatpush1.msra.mxu0 0.0
    %1803 = vmatprep.subr.mxu0 0.0
    %1804 = vmatpush1.msra.mxu0 0.0
    %1805 = vmatprep.subr.mxu0 0.0
    %1806 = vmatpush1.msra.mxu0 0.0
    %1807 = vmatprep.subr.mxu0 0.0
    %1808 = vmatpush1.msra.mxu0 0.0
    %1809 = vmatprep.subr.mxu0 0.0
    %1810 = vmatpush1.msra.mxu0 0.0
    %1811 = vmatprep.subr.mxu0 0.0
    %1812 = vmatpush1.msra.mxu0 0.0
    %1813 = vmatprep.subr.mxu0 0.0
    %1814 = vmatpush1.msra.mxu0 0.0
    %1815 = vmatprep.subr.mxu0 0.0
    %1816 = vmatpush1.msra.mxu0 0.0
    %1817 = vmatprep.subr.mxu0 0.0
    %1818 = vmatpush1.msra.mxu0 0.0
    %1819 = vmatprep.subr.mxu0 0.0
    %1820 = vmatpush1.msra.mxu0 0.0
    %1821 = vmatprep.subr.mxu0 0.0
    %1822 = vmatpush1.msra.mxu0 0.0
    %1823 = vmatprep.subr.mxu0 0.0
    %1824 = vmatpush1.msra.mxu0 0.0
    %1825 = vmatprep.subr.mxu0 0.0
    %1826 = vmatpush1.msra.mxu0 0.0
    %1827 = vmatprep.mubr.f32.mxu0 0.0
    %1828 = vmatmul.mubr.f32.gmra.mrb[0].mxu0 %v1761
    %v1829 = vpop.f32.mrb[0].mxu0
    %v1830 = vadd.f32 %v1758, %v1829
    %v1831 = vpop.f32.mrb[0].mxu0
    %1832 = vdwg.mxu0
    %v1833 = vmul.f32 %v1830, %v1830
    %v1834 = vsel %vm1574, %v1833, 0.0
    %1835 = vadd.xlane.f32.xlu0 %v1834
    %v1836 = vpop.xlane.xlu0 %1835
    %v1837 = vadd.f32 %v1836, 1e-10
    %v1838 = vrsqrt.pop %v1837
    %v1839 = vmul.f32 %v1830, %v1838
    %1840 = vst.msk [vmem:[#allocation25] sm:$0x3] %vm1574, %v1839
    %v1841 = vld [vmem:[#allocation22] sm:$0xff]
    %v1842 = vld [vmem:[#allocation22 + $0x8] sm:$0xff]
    %v1843 = vld [vmem:[#allocation22 + $0x10] sm:$0xff]
    %v1844 = vld [vmem:[#allocation22 + $0x18] sm:$0xff]
    %v1845 = vld [vmem:[#allocation24] sm:$0x1]
    %v1847 = vlaneseq
    %v1848 = vshrl.u32 %v1847, 7
    %v1849 = vsub.s32 0, %v1848
    %v1850 = vrot.slane %v1845, %v1849
    %v1853 = vsel %vm334, %v1839, 0
    %1855 = vmatprep.subr.mxu0 0.0
    %1856 = vmatpush1.msra.mxu0 %v1841
    %1857 = vmatprep.subr.mxu0 0.0
    %1858 = vmatpush1.msra.mxu0 %v1842
    %1859 = vmatprep.subr.mxu0 0.0
    %1860 = vmatpush1.msra.mxu0 %v1843
    %1861 = vmatprep.subr.mxu0 0.0
    %1862 = vmatpush1.msra.mxu0 %v1844
    %1863 = vmatprep.subr.mxu0 0.0
    %1864 = vmatpush1.msra.mxu0 0.0
    %1865 = vmatprep.subr.mxu0 0.0
    %1866 = vmatpush1.msra.mxu0 0.0
    %1867 = vmatprep.subr.mxu0 0.0
    %1868 = vmatpush1.msra.mxu0 0.0
    %1869 = vmatprep.subr.mxu0 0.0
    %1870 = vmatpush1.msra.mxu0 0.0
    %1871 = vmatprep.subr.mxu0 0.0
    %1872 = vmatpush1.msra.mxu0 0.0
    %1873 = vmatprep.subr.mxu0 0.0
    %1874 = vmatpush1.msra.mxu0 0.0
    %1875 = vmatprep.subr.mxu0 0.0
    %1876 = vmatpush1.msra.mxu0 0.0
    %1877 = vmatprep.subr.mxu0 0.0
    %1878 = vmatpush1.msra.mxu0 0.0
    %1879 = vmatprep.subr.mxu0 0.0
    %1880 = vmatpush1.msra.mxu0 0.0
    %1881 = vmatprep.subr.mxu0 0.0
    %1882 = vmatpush1.msra.mxu0 0.0
    %1883 = vmatprep.subr.mxu0 0.0
    %1884 = vmatpush1.msra.mxu0 0.0
    %1885 = vmatprep.subr.mxu0 0.0
    %1886 = vmatpush1.msra.mxu0 0.0
    %1887 = vmatprep.subr.mxu0 0.0
    %1888 = vmatpush1.msra.mxu0 0.0
    %1889 = vmatprep.subr.mxu0 0.0
    %1890 = vmatpush1.msra.mxu0 0.0
    %1891 = vmatprep.subr.mxu0 0.0
    %1892 = vmatpush1.msra.mxu0 0.0
    %1893 = vmatprep.subr.mxu0 0.0
    %1894 = vmatpush1.msra.mxu0 0.0
    %1895 = vmatprep.subr.mxu0 0.0
    %1896 = vmatpush1.msra.mxu0 0.0
    %1897 = vmatprep.subr.mxu0 0.0
    %1898 = vmatpush1.msra.mxu0 0.0
    %1899 = vmatprep.subr.mxu0 0.0
    %1900 = vmatpush1.msra.mxu0 0.0
    %1901 = vmatprep.subr.mxu0 0.0
    %1902 = vmatpush1.msra.mxu0 0.0
    %1903 = vmatprep.subr.mxu0 0.0
    %1904 = vmatpush1.msra.mxu0 0.0
    %1905 = vmatprep.subr.mxu0 0.0
    %1906 = vmatpush1.msra.mxu0 0.0
    %1907 = vmatprep.subr.mxu0 0.0
    %1908 = vmatpush1.msra.mxu0 0.0
    %1909 = vmatprep.subr.mxu0 0.0
    %1910 = vmatpush1.msra.mxu0 0.0
    %1911 = vmatprep.subr.mxu0 0.0
    %1912 = vmatpush1.msra.mxu0 0.0
    %1913 = vmatprep.subr.mxu0 0.0
    %1914 = vmatpush1.msra.mxu0 0.0
    %1915 = vmatprep.subr.mxu0 0.0
    %1916 = vmatpush1.msra.mxu0 0.0
    %1917 = vmatprep.subr.mxu0 0.0
    %1918 = vmatpush1.msra.mxu0 0.0
    %1919 = vmatprep.mubr.f32.mxu0 0.0
    %1920 = vmatmul.mubr.f32.gmra.mrb[0].mxu0 %v1853
    %v1921 = vpop.f32.mrb[0].mxu0
    %v1922 = vadd.f32 %v1850, %v1921
    %v1923 = vpop.f32.mrb[0].mxu0
    %1924 = vdwg.mxu0
    %v1925 = vmax.f32 %v1922, 0.0
    %v1926 = vld [vmem:[%s15] sm:$0xff]
    %v1927 = vld [vmem:[%s15 + $0x8] sm:$0xff]
    %v1928 = vld [vmem:[%s15 + $0x10] sm:$0xff]
    %v1929 = vld [vmem:[%s15 + $0x18] sm:$0xff]
    %v1930 = vld [vmem:[#allocation3] sm:$0x1]
    %v1932 = vlaneseq
    %v1933 = vshrl.u32 %v1932, 7
    %v1934 = vsub.s32 0, %v1933
    %v1935 = vrot.slane %v1930, %v1934
    %v1938 = vsel %vm334, %v1925, 0
    %1940 = vmatprep.subr.mxu0 0.0
    %1941 = vmatpush1.msra.mxu0 %v1926
    %1942 = vmatprep.subr.mxu0 0.0
    %1943 = vmatpush1.msra.mxu0 %v1927
    %1944 = vmatprep.subr.mxu0 0.0
    %1945 = vmatpush1.msra.mxu0 %v1928
    %1946 = vmatprep.subr.mxu0 0.0
    %1947 = vmatpush1.msra.mxu0 %v1929
    %1948 = vmatprep.subr.mxu0 0.0
    %1949 = vmatpush1.msra.mxu0 0.0
    %1950 = vmatprep.subr.mxu0 0.0
    %1951 = vmatpush1.msra.mxu0 0.0
    %1952 = vmatprep.subr.mxu0 0.0
    %1953 = vmatpush1.msra.mxu0 0.0
    %1954 = vmatprep.subr.mxu0 0.0
    %1955 = vmatpush1.msra.mxu0 0.0
    %1956 = vmatprep.subr.mxu0 0.0
    %1957 = vmatpush1.msra.mxu0 0.0
    %1958 = vmatprep.subr.mxu0 0.0
    %1959 = vmatpush1.msra.mxu0 0.0
    %1960 = vmatprep.subr.mxu0 0.0
    %1961 = vmatpush1.msra.mxu0 0.0
    %1962 = vmatprep.subr.mxu0 0.0
    %1963 = vmatpush1.msra.mxu0 0.0
    %1964 = vmatprep.subr.mxu0 0.0
    %1965 = vmatpush1.msra.mxu0 0.0
    %1966 = vmatprep.subr.mxu0 0.0
    %1967 = vmatpush1.msra.mxu0 0.0
    %1968 = vmatprep.subr.mxu0 0.0
    %1969 = vmatpush1.msra.mxu0 0.0
    %1970 = vmatprep.subr.mxu0 0.0
    %1971 = vmatpush1.msra.mxu0 0.0
    %1972 = vmatprep.subr.mxu0 0.0
    %1973 = vmatpush1.msra.mxu0 0.0
    %1974 = vmatprep.subr.mxu0 0.0
    %1975 = vmatpush1.msra.mxu0 0.0
    %1976 = vmatprep.subr.mxu0 0.0
    %1977 = vmatpush1.msra.mxu0 0.0
    %1978 = vmatprep.subr.mxu0 0.0
    %1979 = vmatpush1.msra.mxu0 0.0
    %1980 = vmatprep.subr.mxu0 0.0
    %1981 = vmatpush1.msra.mxu0 0.0
    %1982 = vmatprep.subr.mxu0 0.0
    %1983 = vmatpush1.msra.mxu0 0.0
    %1984 = vmatprep.subr.mxu0 0.0
    %1985 = vmatpush1.msra.mxu0 0.0
    %1986 = vmatprep.subr.mxu0 0.0
    %1987 = vmatpush1.msra.mxu0 0.0
    %1988 = vmatprep.subr.mxu0 0.0
    %1989 = vmatpush1.msra.mxu0 0.0
    %1990 = vmatprep.subr.mxu0 0.0
    %1991 = vmatpush1.msra.mxu0 0.0
    %1992 = vmatprep.subr.mxu0 0.0
    %1993 = vmatpush1.msra.mxu0 0.0
    %1994 = vmatprep.subr.mxu0 0.0
    %1995 = vmatpush1.msra.mxu0 0.0
    %1996 = vmatprep.subr.mxu0 0.0
    %1997 = vmatpush1.msra.mxu0 0.0
    %1998 = vmatprep.subr.mxu0 0.0
    %1999 = vmatpush1.msra.mxu0 0.0
    %2000 = vmatprep.subr.mxu0 0.0
    %2001 = vmatpush1.msra.mxu0 0.0
    %2002 = vmatprep.subr.mxu0 0.0
    %2003 = vmatpush1.msra.mxu0 0.0
    %2004 = vmatprep.mubr.f32.mxu0 0.0
    %2005 = vmatmul.mubr.f32.gmra.mrb[0].mxu0 %v1938
    %v2006 = vpop.f32.mrb[0].mxu0
    %v2007 = vadd.f32 %v1935, %v2006
    %v2008 = vpop.f32.mrb[0].mxu0
    %2009 = vdwg.mxu0
    %2010 = vst.msk [vmem:[%s17] sm:$0x3] %vm226, %v2007
    // Predicated region
    $region122: #{fwd.1} parent=1 // pred_check
      _
    $region123: #{fwd.1} parent=1 // pred_check_branch
      %2012 = sbr.rel (0) target = $region125
    $region124: #{fwd.1} parent=1 // pred_region
      _
    $region125: #{fwd.1} parent=1 // pred_fallthru
      _
    // Predicated region
    $region126: #{fwd.1} parent=1 // pred_check
      _
    $region127: #{fwd.1} parent=1 // pred_check_branch
      %2014 = sbr.rel (0) target = $region129
    $region128: #{fwd.1} parent=1 // pred_region
      _
    $region129: #{fwd.1} parent=1 // pred_fallthru
      _
    // Predicated region
    $region130: #{fwd.1} parent=1 // pred_check
      _
    $region131: #{fwd.1} parent=1 // pred_check_branch
      %2016 = sbr.rel (0) target = $region133
    $region132: #{fwd.1} parent=1 // pred_region
      %s2018 = ssub.s32 32, 32
      %2019 = vsyncadd [#allocation6], %s2018
      %s2021 = sshll.u32 [#allocation25], 4
      %s2022 = int_to_ptr.vmem [resolvable:$true] %s2021
      %2024 = dma.vmem_to_hbm [thread:$0]  %s2022, 32, %s19, [#allocation6]
    $region133: #{fwd.1} parent=1 // pred_fallthru
      _
    // Predicated region
    $region134: #{fwd.1} parent=1 // pred_check
      _
    $region135: #{fwd.1} parent=1 // pred_check_branch
      %2026 = sbr.rel (0) target = $region137
    $region136: #{fwd.1} parent=1 // pred_region
      _
    $region137: #{fwd.1} parent=1 // pred_fallthru
      _
    // Predicated region
    $region138: #{fwd.1} parent=1 // pred_check
      _
    $region139: #{fwd.1} parent=1 // pred_check_branch
      %2028 = sbr.rel (0) target = $region141
    $region140: #{fwd.1} parent=1 // pred_region
      _
    $region141: #{fwd.1} parent=1 // pred_fallthru
      _
    // Predicated region
    $region142: #{fwd.1} parent=1 // pred_check
      _
    $region143: #{fwd.1} parent=1 // pred_check_branch
      %2030 = sbr.rel (0) target = $region145
    $region144: #{fwd.1} parent=1 // pred_region
      %2031 = dma.done [#allocation6], 32
    $region145: #{fwd.1} parent=1 // pred_fallthru
      _
    %2032 = vsyncpa [#allocation5], 1
    %2033 = vsyncpa [#allocation8], 1
    %2034 = vsyncpa [#allocation11], 1
    %2035 = vsyncpa [#allocation14], 1
    %2036 = vsyncpa [#allocation17], 1
    %2037 = vsyncpa [#allocation20], 1
    %2038 = vsyncpa [#allocation23], 1
    %2039 = vsyncpa [#allocation6], 1

</llo_original>
